<compile_context>
chip_gen: v6e
topology: v6e:2x2x1
jax: 0.10.0
libtpu: 0.0.40
codegen_flags: <defaults>
</compile_context>

<pallas_src>
import functools
import math

import jax
import jax.numpy as jnp
from jax.experimental import pallas as pl
from jax.experimental.pallas import tpu as pltpu


def _mha_fused_kernel(num_heads, vl_ref, q_ref, k_ref, v_ref,
                      wq_ref, wk_ref, wv_ref, wo_ref, o_ref, concat_ref):
    """One (batch, q-tile) grid step: full-width Q/K/V projection, per-head
    masked attention written into a bf16 concat scratch, then one big-K W_o."""
    b = pl.program_id(0)
    bf16 = jnp.bfloat16

    # Full-width projections; Wq was pre-scaled by 1/sqrt(dh) at init.
    # Cast the projected buffers to bf16 once (not per head slice).
    qp = jnp.dot(q_ref[0].astype(bf16), wq_ref[...],
                 preferred_element_type=jnp.float32).astype(bf16)   # (tq, D)
    kp = jnp.dot(k_ref[0].astype(bf16), wk_ref[...],
                 preferred_element_type=jnp.float32).astype(bf16)   # (Sk, D)
    vp = jnp.dot(v_ref[0].astype(bf16), wv_ref[...],
                 preferred_element_type=jnp.float32).astype(bf16)   # (Sk, D)
    # TODO(synk): when Sq is tiled (n_qt > 1) the K/V projections are
    # recomputed per q-tile; cache them per-batch in VMEM scratch if needed.

    tq, d = qp.shape
    sk = kp.shape[0]
    dh = d // num_heads

    # masked_softmax: hoisted mask, computed ONCE and reused by every head.
    vl = vl_ref[b]                                                  # SMEM scalar
    col = jax.lax.broadcasted_iota(jnp.int32, (tq, sk), 1)
    neg_bias = jnp.where(col < vl, jnp.float32(0.0), jnp.float32(-1e6))

    for h in range(num_heads):                                      # static unroll (small H)
        lo = h * dh
        hi = lo + dh
        qh = qp[:, lo:hi]                                           # (tq, dh) bf16
        kh = kp[:, lo:hi]                                           # (Sk, dh) bf16
        vh = vp[:, lo:hi]                                           # (Sk, dh) bf16
        # TODO(synk): dh < 128 pads the MXU on the head dim; prefer dh=128
        # models when possible.

        # QK^T contracting last dims (no explicit transpose materialized).
        scores = jax.lax.dot_general(
            qh, kh, dimension_numbers=(((1,), (1,)), ((), ())),
            preferred_element_type=jnp.float32) + neg_bias          # (tq, Sk) f32

        m = jnp.max(scores, axis=-1, keepdims=True)
        p = jnp.exp(scores - m)
        attn = p * pl.reciprocal(jnp.sum(p, axis=-1, keepdims=True), approx=True)
        # TODO(synk): nn.Dropout on attention weights omitted (eval-mode identity).

        out_h = jnp.dot(attn.astype(bf16), vh,
                        preferred_element_type=jnp.float32)         # (tq, dh) f32
        # Stash head output at its lane slice — no live f32 (Sq, D) accumulator.
        concat_ref[:, lo:hi] = out_h.astype(bf16)

    # ONE big-K output projection (tq, D) @ (D, D); single lane-dense store.
    o_ref[0] = jnp.dot(concat_ref[...], wo_ref[...],
                       preferred_element_type=jnp.float32).astype(o_ref.dtype)


def _choose_q_tile(sq):
    """Full-Sq block when small; (8,128)-friendly Sq tile otherwise (keeps the
    per-step working set bounded — mandatory on v7x's 64 MiB VMEM)."""
    if sq <= 512:
        return sq
    for t in (512, 256, 128):
        if sq % t == 0:
            return t
    return sq  # awkward lengths fall back to full-Sq blocks


class MultiHeadAttentionPallas:
    """Pallas TPU implementation of the PyTorch MultiHeadAttention (bias=False)."""

    def __init__(self, key_size, query_size, value_size, num_hiddens, num_heads,
                 dropout, bias=False, *, key, out_dtype=jnp.float32):
        assert num_hiddens % num_heads == 0
        assert not bias
        self.num_heads = num_heads
        self.num_hiddens = num_hiddens
        self.head_dim = num_hiddens // num_heads
        self.out_dtype = out_dtype  # use jnp.bfloat16 on v5e to halve HBM writeback
        kq, kk, kv, ko = jax.random.split(key, 4)
        s = 0.05
        # PyTorch nn.Linear stores weight as (out, in); keep the transposed
        # (in, out) layout so y = x @ W_t matches y = x @ W.T exactly.
        self.Wq_t = jax.random.normal(kq, (query_size, num_hiddens), jnp.float32) * s
        self.Wk_t = jax.random.normal(kk, (key_size, num_hiddens), jnp.float32) * s
        self.Wv_t = jax.random.normal(kv, (value_size, num_hiddens), jnp.float32) * s
        self.Wo_t = jax.random.normal(ko, (num_hiddens, num_hiddens), jnp.float32) * s
        # Hoisted weight prep (done once, not per call):
        #   * bf16 copies for the MXU,
        #   * 1/sqrt(dh) folded into Wq so scores need no per-head scaling.
        scale = 1.0 / math.sqrt(self.head_dim)
        self.Wq_scaled_bf16 = (self.Wq_t * scale).astype(jnp.bfloat16)
        self.Wk_bf16 = self.Wk_t.astype(jnp.bfloat16)
        self.Wv_bf16 = self.Wv_t.astype(jnp.bfloat16)
        self.Wo_bf16 = self.Wo_t.astype(jnp.bfloat16)

    def __call__(self, queries, keys, values, valid_lens):
        B, Sq, Dq = queries.shape
        _, Sk, Dk = keys.shape
        _, _, Dv = values.shape
        D = self.num_hiddens

        if valid_lens is None:
            # All positions valid -> masked softmax == plain softmax.
            valid_lens = jnp.full((B,), Sk, dtype=jnp.int32)
        # TODO(synk): 2-D (per-query) valid_lens of masked_softmax not supported.

        tq = _choose_q_tile(Sq)
        n_qt = Sq // tq
        # TODO(synk): at tiny Sq*B pack several batch elements per grid step to
        # fill the MXU M dimension; at tiny demo shapes this is overhead-bound.

        kernel = functools.partial(_mha_fused_kernel, self.num_heads)

        def const_spec(shape):
            # Constant block index across the grid -> single-buffer the weight
            # (default double-buffering would waste a full D*D bf16 copy).
            return pl.BlockSpec(shape, lambda b, qt, vl: (0, 0),
                                pipeline_mode=pl.Buffered(1))

        out = pl.pallas_call(
            kernel,
            out_shape=jax.ShapeDtypeStruct((B, Sq, D), self.out_dtype),
            grid_spec=pltpu.PrefetchScalarGridSpec(
                num_scalar_prefetch=1,
                grid=(B, n_qt),
                in_specs=[
                    pl.BlockSpec((1, tq, Dq), lambda b, qt, vl: (b, qt, 0)),
                    pl.BlockSpec((1, Sk, Dk), lambda b, qt, vl: (b, 0, 0)),
                    pl.BlockSpec((1, Sk, Dv), lambda b, qt, vl: (b, 0, 0)),
                    const_spec((Dq, D)),
                    const_spec((Dk, D)),
                    const_spec((Dv, D)),
                    const_spec((D, D)),
                ],
                out_specs=pl.BlockSpec((1, tq, D), lambda b, qt, vl: (b, qt, 0)),
                scratch_shapes=[pltpu.VMEM((tq, D), jnp.bfloat16)],
            ),
            compiler_params=pltpu.CompilerParams(
                # Both axes parallel: B and the q-tile axis shard across
                # v7x's two TensorCores; no cross-step state is carried.
                dimension_semantics=("parallel", "parallel"),
                # Raise above the 16/32 MiB default scoped limits (v5e/v6e/v7x)
                # while staying <= every chip's physical VMEM.
                vmem_limit_bytes=64 * 1024 * 1024),
        )(valid_lens.astype(jnp.int32), queries, keys, values,
          self.Wq_scaled_bf16, self.Wk_bf16, self.Wv_bf16, self.Wo_bf16)
        return out


def _reference(mod, q, k, v, valid_lens):
    """Pure-JAX f32 mirror of the PyTorch forward pass (eval mode)."""
    H, dh = mod.num_heads, mod.head_dim

    def t_qkv(x):
        b, s, _ = x.shape
        return x.reshape(b, s, H, dh).transpose(0, 2, 1, 3).reshape(b * H, s, dh)

    Q = t_qkv(q @ mod.Wq_t)
    K = t_qkv(k @ mod.Wk_t)
    V = t_qkv(v @ mod.Wv_t)
    scores = jnp.einsum('bqd,bkd->bqk', Q, K) / math.sqrt(dh)
    vl = jnp.repeat(valid_lens, H)
    col = jnp.arange(scores.shape[-1])
    mask = col[None, None, :] < vl[:, None, None]
    scores = jnp.where(mask, scores, -1e6)
    attn = jax.nn.softmax(scores, axis=-1)
    out = jnp.einsum('bqk,bkd->bqd', attn, V)
    B, Sq = q.shape[0], q.shape[1]
    out = out.reshape(B, H, Sq, dh).transpose(0, 2, 1, 3).reshape(B, Sq, H * dh)
    return out @ mod.Wo_t


if __name__ == "__main__":
    B, S, num_hiddens, num_heads = 2, 8, 32, 4
    key = jax.random.PRNGKey(0)
    k_mod, k_q, k_k, k_v = jax.random.split(key, 4)

    mha = MultiHeadAttentionPallas(
        key_size=num_hiddens, query_size=num_hiddens, value_size=num_hiddens,
        num_hiddens=num_hiddens, num_heads=num_heads, dropout=0.0, bias=False,
        key=k_mod)

    queries = jax.random.normal(k_q, (B, S, num_hiddens), jnp.float32)
    keys = jax.random.normal(k_k, (B, S, num_hiddens), jnp.float32)
    values = jax.random.normal(k_v, (B, S, num_hiddens), jnp.float32)
    valid_lens = jnp.array([3, 8], dtype=jnp.int32)

    out = mha(queries, keys, values, valid_lens)
    out = jax.block_until_ready(out)

    ref = _reference(mha, queries, keys, values, valid_lens)
    assert out.shape == (B, S, num_hiddens)
    # bf16 MXU operands (f32 accumulation), bf16 head-concat scratch, scale
    # folded into bf16 Wq, and the EUP approx reciprocal -> loosened tolerance.
    assert jnp.allclose(out, ref, atol=2e-2, rtol=2e-2), float(jnp.max(jnp.abs(out - ref)))

    print("KERNEL_OK")
</pallas_src>

<mosaic_0001>
module attributes {stable_mosaic.version = 11 : i64} {
  func.func @_mha_fused_kernel(%arg0: i32, %arg1: i32, %arg2: memref<2xi32, #tpu.memory_space<smem>>, %arg3: memref<1x8x32xf32, #tpu.memory_space<vmem>>, %arg4: memref<1x8x32xf32, #tpu.memory_space<vmem>>, %arg5: memref<1x8x32xf32, #tpu.memory_space<vmem>>, %arg6: memref<32x32xbf16, #tpu.memory_space<vmem>>, %arg7: memref<32x32xbf16, #tpu.memory_space<vmem>>, %arg8: memref<32x32xbf16, #tpu.memory_space<vmem>>, %arg9: memref<32x32xbf16, #tpu.memory_space<vmem>>, %arg10: memref<1x8x32xf32, #tpu.memory_space<vmem>>, %arg11: memref<8x32xbf16, #tpu.memory_space<vmem>>) attributes {dimension_semantics = [#tpu.dimension_semantics<parallel>, #tpu.dimension_semantics<parallel>], iteration_bounds = array<i64: 2, 1>, scalar_prefetch = 1 : i64, scratch_operands = 1 : i64, tpu.core_type = #tpu.core_type<tc>, window_params = [{transform_indices = @transform_0, window_bounds = array<i64: 1, 8, 32>}, {transform_indices = @transform_1, window_bounds = array<i64: 1, 8, 32>}, {transform_indices = @transform_2, window_bounds = array<i64: 1, 8, 32>}, {pipeline_mode = #tpu.pipeline_mode<synchronous>, transform_indices = @transform_3, window_bounds = array<i64: 32, 32>}, {pipeline_mode = #tpu.pipeline_mode<synchronous>, transform_indices = @transform_4, window_bounds = array<i64: 32, 32>}, {pipeline_mode = #tpu.pipeline_mode<synchronous>, transform_indices = @transform_5, window_bounds = array<i64: 32, 32>}, {pipeline_mode = #tpu.pipeline_mode<synchronous>, transform_indices = @transform_6, window_bounds = array<i64: 32, 32>}, {transform_indices = @transform_7, window_bounds = array<i64: 1, 8, 32>}]} {
    %c0 = arith.constant 0 : index
    %c0_0 = arith.constant 0 : index
    %c0_1 = arith.constant 0 : index
    %0 = vector.load %arg3[%c0, %c0_0, %c0_1] : memref<1x8x32xf32, #tpu.memory_space<vmem>>, vector<1x8x32xf32>
    %1 = vector.shape_cast %0 : vector<1x8x32xf32> to vector<8x32xf32>
    %2 = arith.truncf %1 : vector<8x32xf32> to vector<8x32xbf16>
    %c0_2 = arith.constant 0 : index
    %c0_3 = arith.constant 0 : index
    %3 = vector.load %arg6[%c0_2, %c0_3] : memref<32x32xbf16, #tpu.memory_space<vmem>>, vector<32x32xbf16>
    %cst = arith.constant dense<0.000000e+00> : vector<8x32xf32>
    %4 = tpu.matmul %2, %3, %cst {dimension_numbers = #tpu.dot_dimension_numbers<[1], [0], [0], [1], [0, 0, 1, 1], [], []>} : vector<8x32xbf16>, vector<32x32xbf16>, vector<8x32xf32> -> vector<8x32xf32>
    %5 = arith.truncf %4 : vector<8x32xf32> to vector<8x32xbf16>
    %c0_4 = arith.constant 0 : index
    %c0_5 = arith.constant 0 : index
    %c0_6 = arith.constant 0 : index
    %6 = vector.load %arg4[%c0_4, %c0_5, %c0_6] : memref<1x8x32xf32, #tpu.memory_space<vmem>>, vector<1x8x32xf32>
    %7 = vector.shape_cast %6 : vector<1x8x32xf32> to vector<8x32xf32>
    %8 = arith.truncf %7 : vector<8x32xf32> to vector<8x32xbf16>
    %c0_7 = arith.constant 0 : index
    %c0_8 = arith.constant 0 : index
    %9 = vector.load %arg7[%c0_7, %c0_8] : memref<32x32xbf16, #tpu.memory_space<vmem>>, vector<32x32xbf16>
    %cst_9 = arith.constant dense<0.000000e+00> : vector<8x32xf32>
    %10 = tpu.matmul %8, %9, %cst_9 {dimension_numbers = #tpu.dot_dimension_numbers<[1], [0], [0], [1], [0, 0, 1, 1], [], []>} : vector<8x32xbf16>, vector<32x32xbf16>, vector<8x32xf32> -> vector<8x32xf32>
    %11 = arith.truncf %10 : vector<8x32xf32> to vector<8x32xbf16>
    %c0_10 = arith.constant 0 : index
    %c0_11 = arith.constant 0 : index
    %c0_12 = arith.constant 0 : index
    %12 = vector.load %arg5[%c0_10, %c0_11, %c0_12] : memref<1x8x32xf32, #tpu.memory_space<vmem>>, vector<1x8x32xf32>
    %13 = vector.shape_cast %12 : vector<1x8x32xf32> to vector<8x32xf32>
    %14 = arith.truncf %13 : vector<8x32xf32> to vector<8x32xbf16>
    %c0_13 = arith.constant 0 : index
    %c0_14 = arith.constant 0 : index
    %15 = vector.load %arg8[%c0_13, %c0_14] : memref<32x32xbf16, #tpu.memory_space<vmem>>, vector<32x32xbf16>
    %cst_15 = arith.constant dense<0.000000e+00> : vector<8x32xf32>
    %16 = tpu.matmul %14, %15, %cst_15 {dimension_numbers = #tpu.dot_dimension_numbers<[1], [0], [0], [1], [0, 0, 1, 1], [], []>} : vector<8x32xbf16>, vector<32x32xbf16>, vector<8x32xf32> -> vector<8x32xf32>
    %17 = arith.truncf %16 : vector<8x32xf32> to vector<8x32xbf16>
    %18 = arith.index_cast %arg0 : i32 to index
    %19 = memref.load %arg2[%18] : memref<2xi32, #tpu.memory_space<smem>>
    %20 = tpu.iota {dimensions = array<i32: 1>} : vector<8x8xi32>
    %21 = vector.broadcast %19 : i32 to vector<8x8xi32>
    %22 = arith.cmpi slt, %20, %21 : vector<8x8xi32>
    %cst_16 = arith.constant 0.000000e+00 : f32
    %cst_17 = arith.constant -1.000000e+06 : f32
    %23 = vector.broadcast %cst_16 : f32 to vector<8x8xf32>
    %24 = vector.broadcast %cst_17 : f32 to vector<8x8xf32>
    %25 = arith.select %22, %23, %24 : vector<8x8xi1>, vector<8x8xf32>
    %26 = vector.extract_strided_slice %5 {offsets = [0, 0], sizes = [8, 8], strides = [1, 1]} : vector<8x32xbf16> to vector<8x8xbf16>
    %27 = vector.extract_strided_slice %11 {offsets = [0, 0], sizes = [8, 8], strides = [1, 1]} : vector<8x32xbf16> to vector<8x8xbf16>
    %28 = vector.extract_strided_slice %17 {offsets = [0, 0], sizes = [8, 8], strides = [1, 1]} : vector<8x32xbf16> to vector<8x8xbf16>
    %cst_18 = arith.constant dense<0.000000e+00> : vector<8x8xf32>
    %29 = tpu.matmul %26, %27, %cst_18 {dimension_numbers = #tpu.dot_dimension_numbers<[1], [1], [0], [0], [0, 0, 1, 0], [], []>} : vector<8x8xbf16>, vector<8x8xbf16>, vector<8x8xf32> -> vector<8x8xf32>
    %30 = arith.addf %29, %25 : vector<8x8xf32>
    %cst_19 = arith.constant dense<0xFF800000> : vector<8xf32>
    %31 = vector.multi_reduction <maximumf>, %30, %cst_19 [1] : vector<8x8xf32> to vector<8xf32>
    %32 = vector.shape_cast %31 : vector<8xf32> to vector<8x1xf32>
    %33 = vector.broadcast %32 : vector<8x1xf32> to vector<8x8xf32>
    %34 = arith.subf %30, %33 : vector<8x8xf32>
    %35 = math.exp %34 : vector<8x8xf32>
    %cst_20 = arith.constant dense<0.000000e+00> : vector<8xf32>
    %36 = vector.multi_reduction <add>, %35, %cst_20 [1] : vector<8x8xf32> to vector<8xf32>
    %37 = vector.shape_cast %36 : vector<8xf32> to vector<8x1xf32>
    %38 = tpu.reciprocal %37 {approx = true} : vector<8x1xf32> -> vector<8x1xf32>
    %39 = vector.broadcast %38 : vector<8x1xf32> to vector<8x8xf32>
    %40 = arith.mulf %35, %39 : vector<8x8xf32>
    %41 = arith.truncf %40 : vector<8x8xf32> to vector<8x8xbf16>
    %cst_21 = arith.constant dense<0.000000e+00> : vector<8x8xf32>
    %42 = tpu.matmul %41, %28, %cst_21 {dimension_numbers = #tpu.dot_dimension_numbers<[1], [0], [0], [1], [0, 0, 1, 1], [], []>} : vector<8x8xbf16>, vector<8x8xbf16>, vector<8x8xf32> -> vector<8x8xf32>
    %43 = arith.truncf %42 : vector<8x8xf32> to vector<8x8xbf16>
    %c0_22 = arith.constant 0 : index
    %c0_23 = arith.constant 0 : index
    %44 = vector.load %arg11[%c0_22, %c0_23] : memref<8x32xbf16, #tpu.memory_space<vmem>>, vector<8x8xbf16>
    tpu.vector_store %arg11[%c0_22, %c0_23], %43 {strides = array<i32>} : memref<8x32xbf16, #tpu.memory_space<vmem>>, vector<8x8xbf16>,
    %45 = vector.extract_strided_slice %5 {offsets = [0, 8], sizes = [8, 8], strides = [1, 1]} : vector<8x32xbf16> to vector<8x8xbf16>
    %46 = vector.extract_strided_slice %11 {offsets = [0, 8], sizes = [8, 8], strides = [1, 1]} : vector<8x32xbf16> to vector<8x8xbf16>
    %47 = vector.extract_strided_slice %17 {offsets = [0, 8], sizes = [8, 8], strides = [1, 1]} : vector<8x32xbf16> to vector<8x8xbf16>
    %cst_24 = arith.constant dense<0.000000e+00> : vector<8x8xf32>
    %48 = tpu.matmul %45, %46, %cst_24 {dimension_numbers = #tpu.dot_dimension_numbers<[1], [1], [0], [0], [0, 0, 1, 0], [], []>} : vector<8x8xbf16>, vector<8x8xbf16>, vector<8x8xf32> -> vector<8x8xf32>
    %49 = arith.addf %48, %25 : vector<8x8xf32>
    %cst_25 = arith.constant dense<0xFF800000> : vector<8xf32>
    %50 = vector.multi_reduction <maximumf>, %49, %cst_25 [1] : vector<8x8xf32> to vector<8xf32>
    %51 = vector.shape_cast %50 : vector<8xf32> to vector<8x1xf32>
    %52 = vector.broadcast %51 : vector<8x1xf32> to vector<8x8xf32>
    %53 = arith.subf %49, %52 : vector<8x8xf32>
    %54 = math.exp %53 : vector<8x8xf32>
    %cst_26 = arith.constant dense<0.000000e+00> : vector<8xf32>
    %55 = vector.multi_reduction <add>, %54, %cst_26 [1] : vector<8x8xf32> to vector<8xf32>
    %56 = vector.shape_cast %55 : vector<8xf32> to vector<8x1xf32>
    %57 = tpu.reciprocal %56 {approx = true} : vector<8x1xf32> -> vector<8x1xf32>
    %58 = vector.broadcast %57 : vector<8x1xf32> to vector<8x8xf32>
    %59 = arith.mulf %54, %58 : vector<8x8xf32>
    %60 = arith.truncf %59 : vector<8x8xf32> to vector<8x8xbf16>
    %cst_27 = arith.constant dense<0.000000e+00> : vector<8x8xf32>
    %61 = tpu.matmul %60, %47, %cst_27 {dimension_numbers = #tpu.dot_dimension_numbers<[1], [0], [0], [1], [0, 0, 1, 1], [], []>} : vector<8x8xbf16>, vector<8x8xbf16>, vector<8x8xf32> -> vector<8x8xf32>
    %62 = arith.truncf %61 : vector<8x8xf32> to vector<8x8xbf16>
    %c0_28 = arith.constant 0 : index
    %c8 = arith.constant 8 : index
    %63 = vector.load %arg11[%c0_28, %c8] : memref<8x32xbf16, #tpu.memory_space<vmem>>, vector<8x8xbf16>
    tpu.vector_store %arg11[%c0_28, %c8], %62 {strides = array<i32>} : memref<8x32xbf16, #tpu.memory_space<vmem>>, vector<8x8xbf16>,
    %64 = vector.extract_strided_slice %5 {offsets = [0, 16], sizes = [8, 8], strides = [1, 1]} : vector<8x32xbf16> to vector<8x8xbf16>
    %65 = vector.extract_strided_slice %11 {offsets = [0, 16], sizes = [8, 8], strides = [1, 1]} : vector<8x32xbf16> to vector<8x8xbf16>
    %66 = vector.extract_strided_slice %17 {offsets = [0, 16], sizes = [8, 8], strides = [1, 1]} : vector<8x32xbf16> to vector<8x8xbf16>
    %cst_29 = arith.constant dense<0.000000e+00> : vector<8x8xf32>
    %67 = tpu.matmul %64, %65, %cst_29 {dimension_numbers = #tpu.dot_dimension_numbers<[1], [1], [0], [0], [0, 0, 1, 0], [], []>} : vector<8x8xbf16>, vector<8x8xbf16>, vector<8x8xf32> -> vector<8x8xf32>
    %68 = arith.addf %67, %25 : vector<8x8xf32>
    %cst_30 = arith.constant dense<0xFF800000> : vector<8xf32>
    %69 = vector.multi_reduction <maximumf>, %68, %cst_30 [1] : vector<8x8xf32> to vector<8xf32>
    %70 = vector.shape_cast %69 : vector<8xf32> to vector<8x1xf32>
    %71 = vector.broadcast %70 : vector<8x1xf32> to vector<8x8xf32>
    %72 = arith.subf %68, %71 : vector<8x8xf32>
    %73 = math.exp %72 : vector<8x8xf32>
    %cst_31 = arith.constant dense<0.000000e+00> : vector<8xf32>
    %74 = vector.multi_reduction <add>, %73, %cst_31 [1] : vector<8x8xf32> to vector<8xf32>
    %75 = vector.shape_cast %74 : vector<8xf32> to vector<8x1xf32>
    %76 = tpu.reciprocal %75 {approx = true} : vector<8x1xf32> -> vector<8x1xf32>
    %77 = vector.broadcast %76 : vector<8x1xf32> to vector<8x8xf32>
    %78 = arith.mulf %73, %77 : vector<8x8xf32>
    %79 = arith.truncf %78 : vector<8x8xf32> to vector<8x8xbf16>
    %cst_32 = arith.constant dense<0.000000e+00> : vector<8x8xf32>
    %80 = tpu.matmul %79, %66, %cst_32 {dimension_numbers = #tpu.dot_dimension_numbers<[1], [0], [0], [1], [0, 0, 1, 1], [], []>} : vector<8x8xbf16>, vector<8x8xbf16>, vector<8x8xf32> -> vector<8x8xf32>
    %81 = arith.truncf %80 : vector<8x8xf32> to vector<8x8xbf16>
    %c0_33 = arith.constant 0 : index
    %c16 = arith.constant 16 : index
    %82 = vector.load %arg11[%c0_33, %c16] : memref<8x32xbf16, #tpu.memory_space<vmem>>, vector<8x8xbf16>
    tpu.vector_store %arg11[%c0_33, %c16], %81 {strides = array<i32>} : memref<8x32xbf16, #tpu.memory_space<vmem>>, vector<8x8xbf16>,
    %83 = vector.extract_strided_slice %5 {offsets = [0, 24], sizes = [8, 8], strides = [1, 1]} : vector<8x32xbf16> to vector<8x8xbf16>
    %84 = vector.extract_strided_slice %11 {offsets = [0, 24], sizes = [8, 8], strides = [1, 1]} : vector<8x32xbf16> to vector<8x8xbf16>
    %85 = vector.extract_strided_slice %17 {offsets = [0, 24], sizes = [8, 8], strides = [1, 1]} : vector<8x32xbf16> to vector<8x8xbf16>
    %cst_34 = arith.constant dense<0.000000e+00> : vector<8x8xf32>
    %86 = tpu.matmul %83, %84, %cst_34 {dimension_numbers = #tpu.dot_dimension_numbers<[1], [1], [0], [0], [0, 0, 1, 0], [], []>} : vector<8x8xbf16>, vector<8x8xbf16>, vector<8x8xf32> -> vector<8x8xf32>
    %87 = arith.addf %86, %25 : vector<8x8xf32>
    %cst_35 = arith.constant dense<0xFF800000> : vector<8xf32>
    %88 = vector.multi_reduction <maximumf>, %87, %cst_35 [1] : vector<8x8xf32> to vector<8xf32>
    %89 = vector.shape_cast %88 : vector<8xf32> to vector<8x1xf32>
    %90 = vector.broadcast %89 : vector<8x1xf32> to vector<8x8xf32>
    %91 = arith.subf %87, %90 : vector<8x8xf32>
    %92 = math.exp %91 : vector<8x8xf32>
    %cst_36 = arith.constant dense<0.000000e+00> : vector<8xf32>
    %93 = vector.multi_reduction <add>, %92, %cst_36 [1] : vector<8x8xf32> to vector<8xf32>
    %94 = vector.shape_cast %93 : vector<8xf32> to vector<8x1xf32>
    %95 = tpu.reciprocal %94 {approx = true} : vector<8x1xf32> -> vector<8x1xf32>
    %96 = vector.broadcast %95 : vector<8x1xf32> to vector<8x8xf32>
    %97 = arith.mulf %92, %96 : vector<8x8xf32>
    %98 = arith.truncf %97 : vector<8x8xf32> to vector<8x8xbf16>
    %cst_37 = arith.constant dense<0.000000e+00> : vector<8x8xf32>
    %99 = tpu.matmul %98, %85, %cst_37 {dimension_numbers = #tpu.dot_dimension_numbers<[1], [0], [0], [1], [0, 0, 1, 1], [], []>} : vector<8x8xbf16>, vector<8x8xbf16>, vector<8x8xf32> -> vector<8x8xf32>
    %100 = arith.truncf %99 : vector<8x8xf32> to vector<8x8xbf16>
    %c0_38 = arith.constant 0 : index
    %c24 = arith.constant 24 : index
    %101 = vector.load %arg11[%c0_38, %c24] : memref<8x32xbf16, #tpu.memory_space<vmem>>, vector<8x8xbf16>
    tpu.vector_store %arg11[%c0_38, %c24], %100 {strides = array<i32>} : memref<8x32xbf16, #tpu.memory_space<vmem>>, vector<8x8xbf16>,
    %c0_39 = arith.constant 0 : index
    %c0_40 = arith.constant 0 : index
    %102 = vector.load %arg11[%c0_39, %c0_40] : memref<8x32xbf16, #tpu.memory_space<vmem>>, vector<8x32xbf16>
    %c0_41 = arith.constant 0 : index
    %c0_42 = arith.constant 0 : index
    %103 = vector.load %arg9[%c0_41, %c0_42] : memref<32x32xbf16, #tpu.memory_space<vmem>>, vector<32x32xbf16>
    %cst_43 = arith.constant dense<0.000000e+00> : vector<8x32xf32>
    %104 = tpu.matmul %102, %103, %cst_43 {dimension_numbers = #tpu.dot_dimension_numbers<[1], [0], [0], [1], [0, 0, 1, 1], [], []>} : vector<8x32xbf16>, vector<32x32xbf16>, vector<8x32xf32> -> vector<8x32xf32>
    %c0_44 = arith.constant 0 : index
    %c0_45 = arith.constant 0 : index
    %c0_46 = arith.constant 0 : index
    %105 = vector.load %arg10[%c0_44, %c0_45, %c0_46] : memref<1x8x32xf32, #tpu.memory_space<vmem>>, vector<1x8x32xf32>
    %106 = vector.shape_cast %105 : vector<1x8x32xf32> to vector<8x32xf32>
    %107 = vector.shape_cast %104 : vector<8x32xf32> to vector<1x8x32xf32>
    tpu.vector_store %arg10[%c0_44, %c0_45, %c0_46], %107 {strides = array<i32>} : memref<1x8x32xf32, #tpu.memory_space<vmem>>, vector<1x8x32xf32>,
    return
  }
  func.func @transform_0(%arg0: i32, %arg1: i32, %arg2: memref<2xi32, #tpu.memory_space<smem>>) -> (i32, i32, i32) {
    %c0_i32 = arith.constant 0 : i32
    %c0_i32_0 = arith.constant 0 : i32
    return %arg0, %arg1, %c0_i32 : i32, i32, i32
  }
  func.func @transform_1(%arg0: i32, %arg1: i32, %arg2: memref<2xi32, #tpu.memory_space<smem>>) -> (i32, i32, i32) {
    %c0_i32 = arith.constant 0 : i32
    %c0_i32_0 = arith.constant 0 : i32
    %c0_i32_1 = arith.constant 0 : i32
    return %arg0, %c0_i32, %c0_i32_0 : i32, i32, i32
  }
  func.func @transform_2(%arg0: i32, %arg1: i32, %arg2: memref<2xi32, #tpu.memory_space<smem>>) -> (i32, i32, i32) {
    %c0_i32 = arith.constant 0 : i32
    %c0_i32_0 = arith.constant 0 : i32
    %c0_i32_1 = arith.constant 0 : i32
    return %arg0, %c0_i32, %c0_i32_0 : i32, i32, i32
  }
  func.func @transform_3(%arg0: i32, %arg1: i32, %arg2: memref<2xi32, #tpu.memory_space<smem>>) -> (i32, i32) {
    %c0_i32 = arith.constant 0 : i32
    %c0_i32_0 = arith.constant 0 : i32
    %c0_i32_1 = arith.constant 0 : i32
    return %c0_i32, %c0_i32_0 : i32, i32
  }
  func.func @transform_4(%arg0: i32, %arg1: i32, %arg2: memref<2xi32, #tpu.memory_space<smem>>) -> (i32, i32) {
    %c0_i32 = arith.constant 0 : i32
    %c0_i32_0 = arith.constant 0 : i32
    %c0_i32_1 = arith.constant 0 : i32
    return %c0_i32, %c0_i32_0 : i32, i32
  }
  func.func @transform_5(%arg0: i32, %arg1: i32, %arg2: memref<2xi32, #tpu.memory_space<smem>>) -> (i32, i32) {
    %c0_i32 = arith.constant 0 : i32
    %c0_i32_0 = arith.constant 0 : i32
    %c0_i32_1 = arith.constant 0 : i32
    return %c0_i32, %c0_i32_0 : i32, i32
  }
  func.func @transform_6(%arg0: i32, %arg1: i32, %arg2: memref<2xi32, #tpu.memory_space<smem>>) -> (i32, i32) {
    %c0_i32 = arith.constant 0 : i32
    %c0_i32_0 = arith.constant 0 : i32
    %c0_i32_1 = arith.constant 0 : i32
    return %c0_i32, %c0_i32_0 : i32, i32
  }
  func.func @transform_7(%arg0: i32, %arg1: i32, %arg2: memref<2xi32, #tpu.memory_space<smem>>) -> (i32, i32, i32) {
    %c0_i32 = arith.constant 0 : i32
    %c0_i32_0 = arith.constant 0 : i32
    return %arg0, %arg1, %c0_i32 : i32, i32, i32
  }
}

</mosaic_0001>

<llo_original>
// kernel: tpu_custom_call.1
$region0: #{tpu_custom_call.1}
  #allocation0 [shape = 'u32[]', space=smem, size = 0x4, offset = 0x4, fixed_abs, tag = 'smem constant byte address 0x4 - core index']
  #allocation1 [shape = 'u32[144,128]{1,0:T(1,128)}', space=vmem, size = 0x12000, scoped, tag = 'internal scratch']
  #allocation2 [shape = 'bf16[8,32]{1,0:T(8,128)(2,1)}', space=vmem, size = 0x800, scoped, tag = 'scratch operand']
  #allocation3 [shape = 's32[1]{0}', space=sflag, size = 0x4, scoped, tag = 'scoped memory for tpu_custom_call.1']
  #allocation4 [shape = 'u8[512]{0}', space=smem, size = 0x200, scoped, tag = 'prefetched SMEM operand 0']
  %s0 = inlined_call_operand.hbm [shape: s32[2], index: 0, kind: input, shape index: {}]
  %s1 = inlined_call_operand.hbm [shape: f32[2,8,32], index: 1, kind: input, shape index: {}]
  %s2 = inlined_call_operand.hbm [shape: f32[2,8,32], index: 2, kind: input, shape index: {}]
  %s3 = inlined_call_operand.hbm [shape: f32[2,8,32], index: 3, kind: input, shape index: {}]
  %s4 = inlined_call_operand.hbm [shape: bf16[32,32], index: 4, kind: input, shape index: {}]
  %s5 = inlined_call_operand.hbm [shape: bf16[32,32], index: 5, kind: input, shape index: {}]
  %s6 = inlined_call_operand.hbm [shape: bf16[32,32], index: 6, kind: input, shape index: {}]
  %s7 = inlined_call_operand.hbm [shape: bf16[32,32], index: 7, kind: input, shape index: {}]
  %s8 = inlined_call_operand.hbm [shape: f32[2,8,32], index: 8, kind: output, shape index: {}]
  %s9 = sld [smem:[#allocation0]]
  $region89: #{tpu_custom_call.1} parent=0
    _
  %s11 = ssub.s32 1, %s9
  %s12 = scalar_select 0, %s11, %s9
  %14 = dma.hbm_to_smem %s0, 16, [#allocation4], [#allocation3]
  %15 = dma.done [#allocation3], 16
  %16 = sfence
  $region1: #{tpu_custom_call.1} parent=0
    #allocation5 [shape = 'u8[8192]{0}', space=vmem, size = 0x2000, scoped, tag = 'input window, operand 1']
    #allocation6 [shape = 's32[2]{0}', space=sflag, size = 0x8, scoped, tag = 'scoped memory for tpu_custom_call.1']
    #allocation7 [shape = 's32[2]{0}', space=sflag, size = 0x8, scoped, tag = 'scoped memory for tpu_custom_call.1']
    #allocation8 [shape = 'u8[8192]{0}', space=vmem, size = 0x2000, scoped, tag = 'input window, operand 2']
    #allocation9 [shape = 's32[2]{0}', space=sflag, size = 0x8, scoped, tag = 'scoped memory for tpu_custom_call.1']
    #allocation10 [shape = 'u8[8192]{0}', space=vmem, size = 0x2000, scoped, tag = 'input window, operand 3']
    #allocation11 [shape = 'u8[8192]{0}', space=vmem, size = 0x2000, scoped, tag = 'input window, operand 4, single buffered']
    #allocation12 [shape = 's32[1]{0}', space=sflag, size = 0x4, scoped, tag = 'scoped memory for tpu_custom_call.1']
    #allocation13 [shape = 'u8[8192]{0}', space=vmem, size = 0x2000, scoped, tag = 'input window, operand 5, single buffered']
    #allocation14 [shape = 'u8[8192]{0}', space=vmem, size = 0x2000, scoped, tag = 'input window, operand 6, single buffered']
    #allocation15 [shape = 's32[1]{0}', space=sflag, size = 0x4, scoped, tag = 'scoped memory for tpu_custom_call.1']
    #allocation16 [shape = 'u8[8192]{0}', space=vmem, size = 0x2000, scoped, tag = 'input window, operand 7, single buffered']
    #allocation17 [shape = 'u8[8192]{0}', space=vmem, size = 0x2000, scoped, tag = 'output window, operand 0']
    %17 = vsyncpa [#allocation6], 0
    %s18 = scalar_lea.sflag [#allocation6], 1
    %19 = vsyncpa %s18, 0
    %20 = vsyncpa [#allocation9], 0
    %s21 = scalar_lea.sflag [#allocation9], 1
    %22 = vsyncpa %s21, 0
    %23 = vsyncpa [#allocation12], 0
    %24 = vsyncpa [#allocation15], 0
    %25 = vsyncpa [#allocation7], 0
    %s26 = scalar_lea.sflag [#allocation7], 1
    %27 = vsyncpa %s26, 0
    loop: start=0, step=1, limit=4
    $region2: #{tpu_custom_call.1} parent=1 // loop_pre_header
      _
    $region3: #{tpu_custom_call.1} parent=1 // loop_header
      %s29 = sphi 0, %s33
      %p30 = scmp.ge.s32.totalorder %s29, 4
      %s36 = sphi 0, %s48
      %s37 = sphi 0, %s44
      %s38 = sphi 0, %s36
      %s39 = sphi 0, %s37
      %s40 = sphi 0, %s38
      %s41 = sphi 0, %s39
      %s53 = sphi 0, %s55
      %s56 = sphi 0, %s53
      %s57 = sphi 0, %s56
      %s73 = sphi 0, %s57
      %s79 = sphi 0, %s81
      %s82 = sphi 0, %s79
      %s83 = sphi 0, %s82
      %s99 = sphi 0, %s83
      %s105 = sphi 0, %s107
      %s108 = sphi 0, %s105
      %s109 = sphi 0, %s108
      %s125 = sphi 0, %s109
      %s129 = sphi 0, %s129
      %s131 = sphi 0, %s129
      %s132 = sphi 0, %s131
      %s146 = sphi 0, %s132
      %s150 = sphi 0, %s150
      %s152 = sphi 0, %s150
      %s153 = sphi 0, %s152
      %s167 = sphi 0, %s153
      %s171 = sphi 0, %s171
      %s173 = sphi 0, %s171
      %s174 = sphi 0, %s173
      %s188 = sphi 0, %s174
      %s192 = sphi 0, %s192
      %s194 = sphi 0, %s192
      %s195 = sphi 0, %s194
      %s209 = sphi 0, %s195
      %s217 = sphi 0, %s219
      %s220 = sphi 0, %s217
      %s221 = sphi 0, %s220
      %s237 = sphi 0, %s221
    $region4: #{tpu_custom_call.1} parent=1 // loop_header_branch
      %32 = sbr.rel (%p30) target = $region8
    $region5: #{tpu_custom_call.1} parent=1 // loop_body
      %s34 = ssub.s32 %s29, 1
      %s35 = ssub.s32 %s29, 2
      %s42 = sadd.s32 1, %s37
      %p43 = scmp.ge.s32.totalorder %s42, 1
      %s44 = scalar_select %p43, 0, %s42
      %s45 = sadd.s32 1, %s36
      %s46 = scalar_select %p43, %s45, %s36
      %p47 = scmp.ge.s32.totalorder %s46, 2
      %s48 = scalar_select %p47, 0, %s46
      %s49 = ssub.s32 %s36, %s48
      %s50 = ssub.s32 %s37, %s44
      %s51 = sor.u32 %s49, %s50
      %p52 = scmp.eq.s32.totalorder %s51, 0
      %s54 = sadd.s32 %s53, 1
      %s55 = scalar_select %p52, %s53, %s54
      %p58 = pneg %p52
      %p59 = scmp.eq.s32.totalorder %s29, 1
      %p60 = por %p58, %p59
      %p61 = scmp.ne.s32.totalorder %s53, %s56
      %p62 = scmp.eq.s32.totalorder %s29, 0
      %p63 = por %p61, %p62
      %p64 = scmp.ne.s32.totalorder %s53, %s56
      %p65 = scmp.eq.s32.totalorder %s34, 1
      %p66 = por %p64, %p65
      %p67 = scmp.ne.s32.totalorder %s56, %s57
      %p68 = scmp.eq.s32.totalorder %s34, 0
      %p69 = por %p67, %p68
      %p70 = scmp.ne.s32.totalorder %s56, %s57
      %p71 = scmp.eq.s32.totalorder %s35, 1
      %p72 = por %p70, %p71
      %p74 = scmp.ne.s32.totalorder %s57, %s73
      %p75 = scmp.eq.s32.totalorder %s35, 0
      %p76 = por %p74, %p75
      %s77 = ssub.s32 %s36, %s48
      %p78 = scmp.eq.s32.totalorder %s77, 0
      %s80 = sadd.s32 %s79, 1
      %s81 = scalar_select %p78, %s79, %s80
      %p84 = pneg %p78
      %p85 = scmp.eq.s32.totalorder %s29, 1
      %p86 = por %p84, %p85
      %p87 = scmp.ne.s32.totalorder %s79, %s82
      %p88 = scmp.eq.s32.totalorder %s29, 0
      %p89 = por %p87, %p88
      %p90 = scmp.ne.s32.totalorder %s79, %s82
      %p91 = scmp.eq.s32.totalorder %s34, 1
      %p92 = por %p90, %p91
      %p93 = scmp.ne.s32.totalorder %s82, %s83
      %p94 = scmp.eq.s32.totalorder %s34, 0
      %p95 = por %p93, %p94
      %p96 = scmp.ne.s32.totalorder %s82, %s83
      %p97 = scmp.eq.s32.totalorder %s35, 1
      %p98 = por %p96, %p97
      %p100 = scmp.ne.s32.totalorder %s83, %s99
      %p101 = scmp.eq.s32.totalorder %s35, 0
      %p102 = por %p100, %p101
      %s103 = ssub.s32 %s36, %s48
      %p104 = scmp.eq.s32.totalorder %s103, 0
      %s106 = sadd.s32 %s105, 1
      %s107 = scalar_select %p104, %s105, %s106
      %p110 = pneg %p104
      %p111 = scmp.eq.s32.totalorder %s29, 1
      %p112 = por %p110, %p111
      %p113 = scmp.ne.s32.totalorder %s105, %s108
      %p114 = scmp.eq.s32.totalorder %s29, 0
      %p115 = por %p113, %p114
      %p116 = scmp.ne.s32.totalorder %s105, %s108
      %p117 = scmp.eq.s32.totalorder %s34, 1
      %p118 = por %p116, %p117
      %p119 = scmp.ne.s32.totalorder %s108, %s109
      %p120 = scmp.eq.s32.totalorder %s34, 0
      %p121 = por %p119, %p120
      %p122 = scmp.ne.s32.totalorder %s108, %s109
      %p123 = scmp.eq.s32.totalorder %s35, 1
      %p124 = por %p122, %p123
      %p126 = scmp.ne.s32.totalorder %s109, %s125
      %p127 = scmp.eq.s32.totalorder %s35, 0
      %p128 = por %p126, %p127
      %s130 = sadd.s32 %s129, 1
      %p133 = scmp.eq.s32.totalorder %s29, 1
      %p134 = scmp.ne.s32.totalorder %s129, %s131
      %p135 = scmp.eq.s32.totalorder %s29, 0
      %p136 = por %p134, %p135
      %p137 = scmp.ne.s32.totalorder %s129, %s131
      %p138 = scmp.eq.s32.totalorder %s34, 1
      %p139 = por %p137, %p138
      %p140 = scmp.ne.s32.totalorder %s131, %s132
      %p141 = scmp.eq.s32.totalorder %s34, 0
      %p142 = por %p140, %p141
      %p143 = scmp.ne.s32.totalorder %s131, %s132
      %p144 = scmp.eq.s32.totalorder %s35, 1
      %p145 = por %p143, %p144
      %p147 = scmp.ne.s32.totalorder %s132, %s146
      %p148 = scmp.eq.s32.totalorder %s35, 0
      %p149 = por %p147, %p148
      %s151 = sadd.s32 %s150, 1
      %p154 = scmp.eq.s32.totalorder %s29, 1
      %p155 = scmp.ne.s32.totalorder %s150, %s152
      %p156 = scmp.eq.s32.totalorder %s29, 0
      %p157 = por %p155, %p156
      %p158 = scmp.ne.s32.totalorder %s150, %s152
      %p159 = scmp.eq.s32.totalorder %s34, 1
      %p160 = por %p158, %p159
      %p161 = scmp.ne.s32.totalorder %s152, %s153
      %p162 = scmp.eq.s32.totalorder %s34, 0
      %p163 = por %p161, %p162
      %p164 = scmp.ne.s32.totalorder %s152, %s153
      %p165 = scmp.eq.s32.totalorder %s35, 1
      %p166 = por %p164, %p165
      %p168 = scmp.ne.s32.totalorder %s153, %s167
      %p169 = scmp.eq.s32.totalorder %s35, 0
      %p170 = por %p168, %p169
      %s172 = sadd.s32 %s171, 1
      %p175 = scmp.eq.s32.totalorder %s29, 1
      %p176 = scmp.ne.s32.totalorder %s171, %s173
      %p177 = scmp.eq.s32.totalorder %s29, 0
      %p178 = por %p176, %p177
      %p179 = scmp.ne.s32.totalorder %s171, %s173
      %p180 = scmp.eq.s32.totalorder %s34, 1
      %p181 = por %p179, %p180
      %p182 = scmp.ne.s32.totalorder %s173, %s174
      %p183 = scmp.eq.s32.totalorder %s34, 0
      %p184 = por %p182, %p183
      %p185 = scmp.ne.s32.totalorder %s173, %s174
      %p186 = scmp.eq.s32.totalorder %s35, 1
      %p187 = por %p185, %p186
      %p189 = scmp.ne.s32.totalorder %s174, %s188
      %p190 = scmp.eq.s32.totalorder %s35, 0
      %p191 = por %p189, %p190
      %s193 = sadd.s32 %s192, 1
      %p196 = scmp.eq.s32.totalorder %s29, 1
      %p197 = scmp.ne.s32.totalorder %s192, %s194
      %p198 = scmp.eq.s32.totalorder %s29, 0
      %p199 = por %p197, %p198
      %p200 = scmp.ne.s32.totalorder %s192, %s194
      %p201 = scmp.eq.s32.totalorder %s34, 1
      %p202 = por %p200, %p201
      %p203 = scmp.ne.s32.totalorder %s194, %s195
      %p204 = scmp.eq.s32.totalorder %s34, 0
      %p205 = por %p203, %p204
      %p206 = scmp.ne.s32.totalorder %s194, %s195
      %p207 = scmp.eq.s32.totalorder %s35, 1
      %p208 = por %p206, %p207
      %p210 = scmp.ne.s32.totalorder %s195, %s209
      %p211 = scmp.eq.s32.totalorder %s35, 0
      %p212 = por %p210, %p211
      %s213 = ssub.s32 %s36, %s48
      %s214 = ssub.s32 %s37, %s44
      %s215 = sor.u32 %s213, %s214
      %p216 = scmp.eq.s32.totalorder %s215, 0
      %s218 = sadd.s32 %s217, 1
      %s219 = scalar_select %p216, %s217, %s218
      %p222 = pneg %p216
      %p223 = scmp.eq.s32.totalorder %s29, 1
      %p224 = por %p222, %p223
      %p225 = scmp.ne.s32.totalorder %s217, %s220
      %p226 = scmp.eq.s32.totalorder %s29, 0
      %p227 = por %p225, %p226
      %p228 = scmp.ne.s32.totalorder %s217, %s220
      %p229 = scmp.eq.s32.totalorder %s34, 1
      %p230 = por %p228, %p229
      %p231 = scmp.ne.s32.totalorder %s220, %s221
      %p232 = scmp.eq.s32.totalorder %s34, 0
      %p233 = por %p231, %p232
      %p234 = scmp.ne.s32.totalorder %s220, %s221
      %p235 = scmp.eq.s32.totalorder %s35, 1
      %p236 = por %p234, %p235
      %p238 = scmp.ne.s32.totalorder %s221, %s237
      %p239 = scmp.eq.s32.totalorder %s35, 0
      %p240 = por %p238, %p239
      %p241 = scmp.le.s32.totalorder 1, %s29
      %p242 = scmp.lt.s32.totalorder %s29, 3
      %p243 = pnand %p241, %p242
      %p244 = pneg %p243
      // Predicated region
      $region9: #{tpu_custom_call.1} parent=5 // pred_check
        _
      $region10: #{tpu_custom_call.1} parent=5 // pred_check_branch
        %246 = sbr.rel (%p243) target = $region12
      $region11: #{tpu_custom_call.1} parent=5 // pred_region
        %s247 = ssub.s32 %s29, 1
        // Predicated region
        $region13: #{tpu_custom_call.1} parent=11 // pred_check
          %p248 = pneg %p142
        $region14: #{tpu_custom_call.1} parent=11 // pred_check_branch
          %250 = sbr.rel (%p248) target = $region16
        $region15: #{tpu_custom_call.1} parent=11 // pred_region
          %s252 = ssub.s32 256, 256
          %253 = vsyncadd [#allocation12], %s252
          %s254 = sshll.u32 [#allocation11], 4
          %s255 = int_to_ptr.vmem [resolvable:$true] %s254
          %260 = dma.hbm_to_vmem [thread:$0]  %s4, 256, %s255, [#allocation12], 64, 64, 4
        $region16: #{tpu_custom_call.1} parent=11 // pred_fallthru
          _
        // Predicated region
        $region17: #{tpu_custom_call.1} parent=11 // pred_check
          %p261 = pneg %p163
        $region18: #{tpu_custom_call.1} parent=11 // pred_check_branch
          %263 = sbr.rel (%p261) target = $region20
        $region19: #{tpu_custom_call.1} parent=11 // pred_region
          %s265 = ssub.s32 256, 256
          %266 = vsyncadd [#allocation12], %s265
          %s267 = sshll.u32 [#allocation13], 4
          %s268 = int_to_ptr.vmem [resolvable:$true] %s267
          %273 = dma.hbm_to_vmem [thread:$0]  %s5, 256, %s268, [#allocation12], 64, 64, 4
        $region20: #{tpu_custom_call.1} parent=11 // pred_fallthru
          _
        // Predicated region
        $region21: #{tpu_custom_call.1} parent=11 // pred_check
          %p274 = pneg %p184
        $region22: #{tpu_custom_call.1} parent=11 // pred_check_branch
          %276 = sbr.rel (%p274) target = $region24
        $region23: #{tpu_custom_call.1} parent=11 // pred_region
          %s278 = ssub.s32 256, 256
          %279 = vsyncadd [#allocation15], %s278
          %s280 = sshll.u32 [#allocation14], 4
          %s281 = int_to_ptr.vmem [resolvable:$true] %s280
          %286 = dma.hbm_to_vmem [thread:$0]  %s6, 256, %s281, [#allocation15], 64, 64, 4
        $region24: #{tpu_custom_call.1} parent=11 // pred_fallthru
          _
        // Predicated region
        $region25: #{tpu_custom_call.1} parent=11 // pred_check
          %p287 = pneg %p205
        $region26: #{tpu_custom_call.1} parent=11 // pred_check_branch
          %289 = sbr.rel (%p287) target = $region28
        $region27: #{tpu_custom_call.1} parent=11 // pred_region
          %s291 = ssub.s32 256, 256
          %292 = vsyncadd [#allocation15], %s291
          %s293 = sshll.u32 [#allocation16], 4
          %s294 = int_to_ptr.vmem [resolvable:$true] %s293
          %299 = dma.hbm_to_vmem [thread:$0]  %s7, 256, %s294, [#allocation15], 64, 64, 4
        $region28: #{tpu_custom_call.1} parent=11 // pred_fallthru
          _
      $region12: #{tpu_custom_call.1} parent=5 // pred_fallthru
        _
      %p300 = scmp.lt.s32.totalorder %s29, 2
      // Predicated region
      $region29: #{tpu_custom_call.1} parent=5 // pred_check
        %p301 = pneg %p300
      $region30: #{tpu_custom_call.1} parent=5 // pred_check_branch
        %303 = sbr.rel (%p301) target = $region32
      $region31: #{tpu_custom_call.1} parent=5 // pred_region
        // Predicated region
        $region33: #{tpu_custom_call.1} parent=31 // pred_check
          %p304 = pneg %p63
        $region34: #{tpu_custom_call.1} parent=31 // pred_check_branch
          %306 = sbr.rel (%p304) target = $region36
        $region35: #{tpu_custom_call.1} parent=31 // pred_region
          %s307 = sand.u32 %s53, 1
          %s308 = scalar_lea.sflag [#allocation6], %s307
          %s309 = sand.u32 %s53, 1
          %s310 = smul.addr %s309, 8
          %s311 = scalar_lea.vmem [#allocation5], %s310
          %s313 = ssub.s32 128, 128
          %314 = vsyncadd %s308, %s313
          %s315 = sadd.s32 %s37, %s36
          %s316 = smul.addr %s315, 128
          %s317 = scalar_lea.hbm %s1, %s316
          %s319 = sshll.u32 %s311, 4
          %s320 = int_to_ptr.vmem [resolvable:$true] %s319
          %322 = dma.hbm_to_vmem [thread:$0]  %s317, 128, %s320, %s308
        $region36: #{tpu_custom_call.1} parent=31 // pred_fallthru
          _
        // Predicated region
        $region37: #{tpu_custom_call.1} parent=31 // pred_check
          %p323 = pneg %p89
        $region38: #{tpu_custom_call.1} parent=31 // pred_check_branch
          %325 = sbr.rel (%p323) target = $region40
        $region39: #{tpu_custom_call.1} parent=31 // pred_region
          %s326 = sand.u32 %s29, 1
          %s327 = scalar_lea.sflag [#allocation9], %s326
          %s328 = sand.u32 %s79, 1
          %s329 = smul.addr %s328, 8
          %s330 = scalar_lea.vmem [#allocation8], %s329
          %s332 = ssub.s32 128, 128
          %333 = vsyncadd %s327, %s332
          %s334 = smul.addr %s36, 128
          %s335 = scalar_lea.hbm %s2, %s334
          %s337 = sshll.u32 %s330, 4
          %s338 = int_to_ptr.vmem [resolvable:$true] %s337
          %340 = dma.hbm_to_vmem [thread:$0]  %s335, 128, %s338, %s327
        $region40: #{tpu_custom_call.1} parent=31 // pred_fallthru
          _
        // Predicated region
        $region41: #{tpu_custom_call.1} parent=31 // pred_check
          %p341 = pneg %p115
        $region42: #{tpu_custom_call.1} parent=31 // pred_check_branch
          %343 = sbr.rel (%p341) target = $region44
        $region43: #{tpu_custom_call.1} parent=31 // pred_region
          %s344 = sand.u32 %s29, 1
          %s345 = scalar_lea.sflag [#allocation9], %s344
          %s346 = sand.u32 %s105, 1
          %s347 = smul.addr %s346, 8
          %s348 = scalar_lea.vmem [#allocation10], %s347
          %s350 = ssub.s32 128, 128
          %351 = vsyncadd %s345, %s350
          %s352 = smul.addr %s36, 128
          %s353 = scalar_lea.hbm %s3, %s352
          %s355 = sshll.u32 %s348, 4
          %s356 = int_to_ptr.vmem [resolvable:$true] %s355
          %358 = dma.hbm_to_vmem [thread:$0]  %s353, 128, %s356, %s345
        $region44: #{tpu_custom_call.1} parent=31 // pred_fallthru
          _
      $region32: #{tpu_custom_call.1} parent=5 // pred_fallthru
        _
      %p359 = scmp.le.s32.totalorder 1, %s29
      %p360 = scmp.lt.s32.totalorder %s29, 3
      %p361 = pnand %p359, %p360
      %p362 = pneg %p361
      // Predicated region
      $region45: #{tpu_custom_call.1} parent=5 // pred_check
        _
      $region46: #{tpu_custom_call.1} parent=5 // pred_check_branch
        %364 = sbr.rel (%p361) target = $region48
      $region47: #{tpu_custom_call.1} parent=5 // pred_region
        %s365 = ssub.s32 %s29, 1
        %s366 = sand.u32 %s56, 1
        %s367 = scalar_lea.sflag [#allocation6], %s366
        %s368 = sand.u32 %s56, 1
        %s369 = smul.addr %s368, 8
        %s370 = scalar_lea.vmem [#allocation5], %s369
        // Predicated region
        $region49: #{tpu_custom_call.1} parent=47 // pred_check
          %p371 = pneg %p69
        $region50: #{tpu_custom_call.1} parent=47 // pred_check_branch
          %373 = sbr.rel (%p371) target = $region52
        $region51: #{tpu_custom_call.1} parent=47 // pred_region
          %374 = dma.done %s367, 128
        $region52: #{tpu_custom_call.1} parent=47 // pred_fallthru
          _
        %s375 = sand.u32 %s34, 1
        %s376 = scalar_lea.sflag [#allocation9], %s375
        %s377 = sand.u32 %s82, 1
        %s378 = smul.addr %s377, 8
        %s379 = scalar_lea.vmem [#allocation8], %s378
        // Predicated region
        $region53: #{tpu_custom_call.1} parent=47 // pred_check
          %p380 = pneg %p95
        $region54: #{tpu_custom_call.1} parent=47 // pred_check_branch
          %382 = sbr.rel (%p380) target = $region56
        $region55: #{tpu_custom_call.1} parent=47 // pred_region
          %383 = dma.done %s376, 128
        $region56: #{tpu_custom_call.1} parent=47 // pred_fallthru
          _
        %s384 = sand.u32 %s34, 1
        %s385 = scalar_lea.sflag [#allocation9], %s384
        %s386 = sand.u32 %s108, 1
        %s387 = smul.addr %s386, 8
        %s388 = scalar_lea.vmem [#allocation10], %s387
        // Predicated region
        $region57: #{tpu_custom_call.1} parent=47 // pred_check
          %p389 = pneg %p121
        $region58: #{tpu_custom_call.1} parent=47 // pred_check_branch
          %391 = sbr.rel (%p389) target = $region60
        $region59: #{tpu_custom_call.1} parent=47 // pred_region
          %392 = dma.done %s385, 128
        $region60: #{tpu_custom_call.1} parent=47 // pred_fallthru
          _
        // Predicated region
        $region61: #{tpu_custom_call.1} parent=47 // pred_check
          %p393 = pneg %p142
        $region62: #{tpu_custom_call.1} parent=47 // pred_check_branch
          %395 = sbr.rel (%p393) target = $region64
        $region63: #{tpu_custom_call.1} parent=47 // pred_region
          %396 = dma.done [#allocation12], 256
        $region64: #{tpu_custom_call.1} parent=47 // pred_fallthru
          _
        // Predicated region
        $region65: #{tpu_custom_call.1} parent=47 // pred_check
          %p397 = pneg %p163
        $region66: #{tpu_custom_call.1} parent=47 // pred_check_branch
          %399 = sbr.rel (%p397) target = $region68
        $region67: #{tpu_custom_call.1} parent=47 // pred_region
          %400 = dma.done [#allocation12], 256
        $region68: #{tpu_custom_call.1} parent=47 // pred_fallthru
          _
        // Predicated region
        $region69: #{tpu_custom_call.1} parent=47 // pred_check
          %p401 = pneg %p184
        $region70: #{tpu_custom_call.1} parent=47 // pred_check_branch
          %403 = sbr.rel (%p401) target = $region72
        $region71: #{tpu_custom_call.1} parent=47 // pred_region
          %404 = dma.done [#allocation15], 256
        $region72: #{tpu_custom_call.1} parent=47 // pred_fallthru
          _
        // Predicated region
        $region73: #{tpu_custom_call.1} parent=47 // pred_check
          %p405 = pneg %p205
        $region74: #{tpu_custom_call.1} parent=47 // pred_check_branch
          %407 = sbr.rel (%p405) target = $region76
        $region75: #{tpu_custom_call.1} parent=47 // pred_region
          %408 = dma.done [#allocation15], 256
        $region76: #{tpu_custom_call.1} parent=47 // pred_fallthru
          _
        %s409 = sand.u32 %s56, 1
        %s410 = scalar_lea.sflag [#allocation6], %s409
        %s411 = sand.u32 %s56, 1
        %s412 = smul.addr %s411, 8
        %s413 = scalar_lea.vmem [#allocation5], %s412
        %p414 = pneg %p69
        %p415 = pneg %p66
        %s416 = sand.u32 %s34, 1
        %s417 = scalar_lea.sflag [#allocation9], %s416
        %s418 = sand.u32 %s82, 1
        %s419 = smul.addr %s418, 8
        %s420 = scalar_lea.vmem [#allocation8], %s419
        %p421 = pneg %p95
        %p422 = pneg %p92
        %s423 = sand.u32 %s34, 1
        %s424 = scalar_lea.sflag [#allocation9], %s423
        %s425 = sand.u32 %s108, 1
        %s426 = smul.addr %s425, 8
        %s427 = scalar_lea.vmem [#allocation10], %s426
        %p428 = pneg %p121
        %p429 = pneg %p118
        %p430 = pneg %p142
        %p431 = pneg %p139
        %p432 = pneg %p163
        %p433 = pneg %p160
        %p434 = pneg %p184
        %p435 = pneg %p181
        %p436 = pneg %p205
        %p437 = pneg %p202
        %p438 = pneg %p233
        %p439 = pneg %p230
        %s440 = sand.u32 %s220, 1
        %s441 = scalar_lea.sflag [#allocation7], %s440
        %s442 = sand.u32 %s220, 1
        %s443 = smul.addr %s442, 8
        %s444 = scalar_lea.vmem [#allocation17], %s443
        %v446 = vld [vmem:[%s370] sm:$0xff]
        %v447 = vpack.c.bf16 %v446, %v446
        %v448 = vld [vmem:[#allocation11] sm:$0xf]
        %v449 = vld [vmem:[#allocation11 + $0x4] sm:$0xf]
        %v450 = vld [vmem:[#allocation11 + $0x8] sm:$0xf]
        %v451 = vld [vmem:[#allocation11 + $0xc] sm:$0xf]
        %v456 = vunpack.c.l.b16 %v448
        %v457 = vunpack.c.l.b16 %v449
        %v458 = vunpack.c.l.b16 %v450
        %v459 = vunpack.c.l.b16 %v451
        %v460 = vpack.c.b16 %v457, %v456
        %v461 = vpack.c.b16 %v459, %v458
        %vm464 = vcmask 261120
        %v466 = vsel %vm464, %v447, 0
        %468 = vmatprep.subr.bf16.mxu0 0
        %469 = vmatpush1.bf16.msra.mxu0 0
        %470 = vmatprep.subr.bf16.mxu0 0
        %471 = vmatpush1.bf16.msra.mxu0 0
        %472 = vmatprep.subr.bf16.mxu0 0
        %473 = vmatpush1.bf16.msra.mxu0 0
        %474 = vmatprep.subr.bf16.mxu0 0
        %475 = vmatpush1.bf16.msra.mxu0 0
        %476 = vmatprep.subr.bf16.mxu0 0
        %477 = vmatpush1.bf16.msra.mxu0 0
        %478 = vmatprep.subr.bf16.mxu0 0
        %479 = vmatpush1.bf16.msra.mxu0 0
        %480 = vmatprep.subr.bf16.mxu0 0
        %481 = vmatpush1.bf16.msra.mxu0 %v461
        %482 = vmatprep.subr.bf16.mxu0 0
        %483 = vmatpush1.bf16.msra.mxu0 %v460
        %484 = vmatprep.subr.bf16.mxu0 0
        %485 = vmatpush2.bf16.msra.mxu0 0
        %486 = vmatprep.subr.bf16.mxu0 0
        %487 = vmatpush2.bf16.msra.mxu0 0
        %488 = vmatprep.subr.bf16.mxu0 0
        %489 = vmatpush2.bf16.msra.mxu0 0
        %490 = vmatprep.subr.bf16.mxu0 0
        %491 = vmatpush2.bf16.msra.mxu0 0
        %492 = vmatprep.subr.bf16.mxu0 0
        %493 = vmatpush2.bf16.msra.mxu0 0
        %494 = vmatprep.subr.bf16.mxu0 0
        %495 = vmatpush2.bf16.msra.mxu0 0
        %496 = vmatprep.subr.bf16.mxu0 0
        %497 = vmatpush2.bf16.msra.mxu0 0
        %498 = vmatprep.subr.bf16.mxu0 0
        %499 = vmatpush2.bf16.msra.mxu0 0
        %500 = vmatprep.mubr.bf16.mxu0 0
        %501 = vmatmul.mubr.bf16.gmra.mxu0 %v466
        %v502 = vpop.f32.mrf.mxu0
        %v503 = vadd.f32 0.0, %v502
        %v504 = vpop.f32.mrf.mxu0
        %v505 = vpop.f32.mrf.mxu0
        %v506 = vpop.f32.mrf.mxu0
        %507 = vdwg.mxu0
        %v508 = vpack.c.bf16 %v503, %v503
        %v509 = vld [vmem:[%s379] sm:$0xff]
        %v510 = vpack.c.bf16 %v509, %v509
        %v511 = vld [vmem:[#allocation13] sm:$0xf]
        %v512 = vld [vmem:[#allocation13 + $0x4] sm:$0xf]
        %v513 = vld [vmem:[#allocation13 + $0x8] sm:$0xf]
        %v514 = vld [vmem:[#allocation13 + $0xc] sm:$0xf]
        %v519 = vunpack.c.l.b16 %v511
        %v520 = vunpack.c.l.b16 %v512
        %v521 = vunpack.c.l.b16 %v513
        %v522 = vunpack.c.l.b16 %v514
        %v523 = vpack.c.b16 %v520, %v519
        %v524 = vpack.c.b16 %v522, %v521
        %v528 = vsel %vm464, %v510, 0
        %530 = vmatprep.subr.bf16.mxu0 0
        %531 = vmatpush1.bf16.msra.mxu0 0
        %532 = vmatprep.subr.bf16.mxu0 0
        %533 = vmatpush1.bf16.msra.mxu0 0
        %534 = vmatprep.subr.bf16.mxu0 0
        %535 = vmatpush1.bf16.msra.mxu0 0
        %536 = vmatprep.subr.bf16.mxu0 0
        %537 = vmatpush1.bf16.msra.mxu0 0
        %538 = vmatprep.subr.bf16.mxu0 0
        %539 = vmatpush1.bf16.msra.mxu0 0
        %540 = vmatprep.subr.bf16.mxu0 0
        %541 = vmatpush1.bf16.msra.mxu0 0
        %542 = vmatprep.subr.bf16.mxu0 0
        %543 = vmatpush1.bf16.msra.mxu0 %v524
        %544 = vmatprep.subr.bf16.mxu0 0
        %545 = vmatpush1.bf16.msra.mxu0 %v523
        %546 = vmatprep.subr.bf16.mxu0 0
        %547 = vmatpush2.bf16.msra.mxu0 0
        %548 = vmatprep.subr.bf16.mxu0 0
        %549 = vmatpush2.bf16.msra.mxu0 0
        %550 = vmatprep.subr.bf16.mxu0 0
        %551 = vmatpush2.bf16.msra.mxu0 0
        %552 = vmatprep.subr.bf16.mxu0 0
        %553 = vmatpush2.bf16.msra.mxu0 0
        %554 = vmatprep.subr.bf16.mxu0 0
        %555 = vmatpush2.bf16.msra.mxu0 0
        %556 = vmatprep.subr.bf16.mxu0 0
        %557 = vmatpush2.bf16.msra.mxu0 0
        %558 = vmatprep.subr.bf16.mxu0 0
        %559 = vmatpush2.bf16.msra.mxu0 0
        %560 = vmatprep.subr.bf16.mxu0 0
        %561 = vmatpush2.bf16.msra.mxu0 0
        %562 = vmatprep.mubr.bf16.mxu0 0
        %563 = vmatmul.mubr.bf16.gmra.mxu0 %v528
        %v564 = vpop.f32.mrf.mxu0
        %v565 = vadd.f32 0.0, %v564
        %v566 = vpop.f32.mrf.mxu0
        %v567 = vpop.f32.mrf.mxu0
        %v568 = vpop.f32.mrf.mxu0
        %569 = vdwg.mxu0
        %v570 = vpack.c.bf16 %v565, %v565
        %v571 = vld [vmem:[%s388] sm:$0xff]
        %v572 = vpack.c.bf16 %v571, %v571
        %v573 = vld [vmem:[#allocation14] sm:$0xf]
        %v574 = vld [vmem:[#allocation14 + $0x4] sm:$0xf]
        %v575 = vld [vmem:[#allocation14 + $0x8] sm:$0xf]
        %v576 = vld [vmem:[#allocation14 + $0xc] sm:$0xf]
        %v581 = vunpack.c.l.b16 %v573
        %v582 = vunpack.c.l.b16 %v574
        %v583 = vunpack.c.l.b16 %v575
        %v584 = vunpack.c.l.b16 %v576
        %v585 = vpack.c.b16 %v582, %v581
        %v586 = vpack.c.b16 %v584, %v583
        %v590 = vsel %vm464, %v572, 0
        %592 = vmatprep.subr.bf16.mxu0 0
        %593 = vmatpush1.bf16.msra.mxu0 0
        %594 = vmatprep.subr.bf16.mxu0 0
        %595 = vmatpush1.bf16.msra.mxu0 0
        %596 = vmatprep.subr.bf16.mxu0 0
        %597 = vmatpush1.bf16.msra.mxu0 0
        %598 = vmatprep.subr.bf16.mxu0 0
        %599 = vmatpush1.bf16.msra.mxu0 0
        %600 = vmatprep.subr.bf16.mxu0 0
        %601 = vmatpush1.bf16.msra.mxu0 0
        %602 = vmatprep.subr.bf16.mxu0 0
        %603 = vmatpush1.bf16.msra.mxu0 0
        %604 = vmatprep.subr.bf16.mxu0 0
        %605 = vmatpush1.bf16.msra.mxu0 %v586
        %606 = vmatprep.subr.bf16.mxu0 0
        %607 = vmatpush1.bf16.msra.mxu0 %v585
        %608 = vmatprep.subr.bf16.mxu0 0
        %609 = vmatpush2.bf16.msra.mxu0 0
        %610 = vmatprep.subr.bf16.mxu0 0
        %611 = vmatpush2.bf16.msra.mxu0 0
        %612 = vmatprep.subr.bf16.mxu0 0
        %613 = vmatpush2.bf16.msra.mxu0 0
        %614 = vmatprep.subr.bf16.mxu0 0
        %615 = vmatpush2.bf16.msra.mxu0 0
        %616 = vmatprep.subr.bf16.mxu0 0
        %617 = vmatpush2.bf16.msra.mxu0 0
        %618 = vmatprep.subr.bf16.mxu0 0
        %619 = vmatpush2.bf16.msra.mxu0 0
        %620 = vmatprep.subr.bf16.mxu0 0
        %621 = vmatpush2.bf16.msra.mxu0 0
        %622 = vmatprep.subr.bf16.mxu0 0
        %623 = vmatpush2.bf16.msra.mxu0 0
        %624 = vmatprep.mubr.bf16.mxu0 0
        %625 = vmatmul.mubr.bf16.gmra.mxu0 %v590
        %v626 = vpop.f32.mrf.mxu0
        %v627 = vadd.f32 0.0, %v626
        %v628 = vpop.f32.mrf.mxu0
        %v629 = vpop.f32.mrf.mxu0
        %v630 = vpop.f32.mrf.mxu0
        %631 = vdwg.mxu0
        %v632 = vpack.c.bf16 %v627, %v627
        %s633 = sld [smem:[#allocation4 + %s38]]
        %v634 = vlaneseq
        %v635 = vand.u32 %v634, 127
        %v636 = vstv %s633
        %vm637 = vcmp.lt.s32.totalorder %v635, %v636
        %v638 = vsel %vm637, 0.0, -1000000.0
        %vm639 = vcmask 64512
        %v641 = vsel %vm639, %v508, 0
        %v644 = vsel %vm639, %v570, 0
        %646 = vmatprep.subr.bf16.mxu0 0
        %647 = vmatpush1.bf16.xpose.msra.mxu0 0
        %648 = vmatprep.subr.bf16.mxu0 0
        %649 = vmatpush1.bf16.xpose.msra.mxu0 0
        %650 = vmatprep.subr.bf16.mxu0 0
        %651 = vmatpush1.bf16.xpose.msra.mxu0 0
        %652 = vmatprep.subr.bf16.mxu0 0
        %653 = vmatpush1.bf16.xpose.msra.mxu0 0
        %654 = vmatprep.subr.bf16.mxu0 0
        %655 = vmatpush1.bf16.xpose.msra.mxu0 0
        %656 = vmatprep.subr.bf16.mxu0 0
        %657 = vmatpush1.bf16.xpose.msra.mxu0 0
        %658 = vmatprep.subr.bf16.mxu0 0
        %659 = vmatpush1.bf16.xpose.msra.mxu0 0
        %660 = vmatprep.subr.bf16.mxu0 0
        %661 = vmatpush1.bf16.xpose.msra.mxu0 %v644
        %662 = vmatprep.subr.bf16.mxu0 0
        %663 = vmatpush2.bf16.xpose.msra.mxu0 0
        %664 = vmatprep.subr.bf16.mxu0 0
        %665 = vmatpush2.bf16.xpose.msra.mxu0 0
        %666 = vmatprep.subr.bf16.mxu0 0
        %667 = vmatpush2.bf16.xpose.msra.mxu0 0
        %668 = vmatprep.subr.bf16.mxu0 0
        %669 = vmatpush2.bf16.xpose.msra.mxu0 0
        %670 = vmatprep.subr.bf16.mxu0 0
        %671 = vmatpush2.bf16.xpose.msra.mxu0 0
        %672 = vmatprep.subr.bf16.mxu0 0
        %673 = vmatpush2.bf16.xpose.msra.mxu0 0
        %674 = vmatprep.subr.bf16.mxu0 0
        %675 = vmatpush2.bf16.xpose.msra.mxu0 0
        %676 = vmatprep.subr.bf16.mxu0 0
        %677 = vmatpush2.bf16.xpose.msra.mxu0 0
        %678 = vmatprep.mubr.bf16.mxu0 0
        %679 = vmatmul.mubr.bf16.gmra.mxu0 %v641
        %v680 = vpop.f32.mrf.mxu0
        %v681 = vadd.f32 %v638, %v680
        %v682 = vpop.f32.mrf.mxu0
        %v683 = vpop.f32.mrf.mxu0
        %v684 = vpop.f32.mrf.mxu0
        %685 = vdwg.mxu0
        %v686 = vsel %vm639, %v681, -inf
        %687 = vmax.xlane.f32.xlu0 %v686
        %v688 = vpop.xlane.xlu0 %687
        %v689 = vsub.f32 %v681, %v688
        %v690 = vmul.f32 %v689, 1.442695
        %v691 = vpow.pop %v690
        %v692 = vsel %vm639, %v691, 0.0
        %693 = vadd.xlane.f32.xlu0 %v692
        %v694 = vpop.xlane.xlu0 %693
        %v695 = vrcp.pop %v694
        %v696 = vmul.f32 %v691, %v695
        %v697 = vpack.c.bf16 %v696, %v696
        %v699 = vsel %vm639, %v697, 0
        %vm701 = vcmask 1043456
        %v703 = vsel %vm701, %v632, 0
        %705 = vmatprep.subr.bf16.mxu0 0
        %706 = vmatpush1.bf16.msra.mxu0 0
        %707 = vmatprep.subr.bf16.mxu0 0
        %708 = vmatpush1.bf16.msra.mxu0 0
        %709 = vmatprep.subr.bf16.mxu0 0
        %710 = vmatpush1.bf16.msra.mxu0 0
        %711 = vmatprep.subr.bf16.mxu0 0
        %712 = vmatpush1.bf16.msra.mxu0 0
        %713 = vmatprep.subr.bf16.mxu0 0
        %714 = vmatpush1.bf16.msra.mxu0 0
        %715 = vmatprep.subr.bf16.mxu0 0
        %716 = vmatpush1.bf16.msra.mxu0 0
        %717 = vmatprep.subr.bf16.mxu0 0
        %718 = vmatpush1.bf16.msra.mxu0 0
        %719 = vmatprep.subr.bf16.mxu0 0
        %720 = vmatpush1.bf16.msra.mxu0 %v703
        %721 = vmatprep.subr.bf16.mxu0 0
        %722 = vmatpush2.bf16.msra.mxu0 0
        %723 = vmatprep.subr.bf16.mxu0 0
        %724 = vmatpush2.bf16.msra.mxu0 0
        %725 = vmatprep.subr.bf16.mxu0 0
        %726 = vmatpush2.bf16.msra.mxu0 0
        %727 = vmatprep.subr.bf16.mxu0 0
        %728 = vmatpush2.bf16.msra.mxu0 0
        %729 = vmatprep.subr.bf16.mxu0 0
        %730 = vmatpush2.bf16.msra.mxu0 0
        %731 = vmatprep.subr.bf16.mxu0 0
        %732 = vmatpush2.bf16.msra.mxu0 0
        %733 = vmatprep.subr.bf16.mxu0 0
        %734 = vmatpush2.bf16.msra.mxu0 0
        %735 = vmatprep.subr.bf16.mxu0 0
        %736 = vmatpush2.bf16.msra.mxu0 0
        %737 = vmatprep.mubr.bf16.mxu0 0
        %738 = vmatmul.mubr.bf16.gmra.mxu0 %v699
        %v739 = vpop.f32.mrf.mxu0
        %v740 = vadd.f32 0.0, %v739
        %v741 = vpop.f32.mrf.mxu0
        %v742 = vpop.f32.mrf.mxu0
        %v743 = vpop.f32.mrf.mxu0
        %744 = vdwg.mxu0
        %v745 = vpack.c.bf16 %v740, %v740
        %vm746 = vcmask 60416
        %747 = vst.msk [vmem:[#allocation2] sm:$0xf] %vm746, %v745
        %749 = vrot.lane.b32.xlu0 %v508, 120
        %v750 = vpop.permute.xlu0 %749
        %752 = vrot.lane.b32.xlu0 %v570, 120
        %v753 = vpop.permute.xlu0 %752
        %v755 = vsel %vm639, %v750, 0
        %v758 = vsel %vm639, %v753, 0
        %760 = vmatprep.subr.bf16.mxu0 0
        %761 = vmatpush1.bf16.xpose.msra.mxu0 0
        %762 = vmatprep.subr.bf16.mxu0 0
        %763 = vmatpush1.bf16.xpose.msra.mxu0 0
        %764 = vmatprep.subr.bf16.mxu0 0
        %765 = vmatpush1.bf16.xpose.msra.mxu0 0
        %766 = vmatprep.subr.bf16.mxu0 0
        %767 = vmatpush1.bf16.xpose.msra.mxu0 0
        %768 = vmatprep.subr.bf16.mxu0 0
        %769 = vmatpush1.bf16.xpose.msra.mxu0 0
        %770 = vmatprep.subr.bf16.mxu0 0
        %771 = vmatpush1.bf16.xpose.msra.mxu0 0
        %772 = vmatprep.subr.bf16.mxu0 0
        %773 = vmatpush1.bf16.xpose.msra.mxu0 0
        %774 = vmatprep.subr.bf16.mxu0 0
        %775 = vmatpush1.bf16.xpose.msra.mxu0 %v758
        %776 = vmatprep.subr.bf16.mxu0 0
        %777 = vmatpush2.bf16.xpose.msra.mxu0 0
        %778 = vmatprep.subr.bf16.mxu0 0
        %779 = vmatpush2.bf16.xpose.msra.mxu0 0
        %780 = vmatprep.subr.bf16.mxu0 0
        %781 = vmatpush2.bf16.xpose.msra.mxu0 0
        %782 = vmatprep.subr.bf16.mxu0 0
        %783 = vmatpush2.bf16.xpose.msra.mxu0 0
        %784 = vmatprep.subr.bf16.mxu0 0
        %785 = vmatpush2.bf16.xpose.msra.mxu0 0
        %786 = vmatprep.subr.bf16.mxu0 0
        %787 = vmatpush2.bf16.xpose.msra.mxu0 0
        %788 = vmatprep.subr.bf16.mxu0 0
        %789 = vmatpush2.bf16.xpose.msra.mxu0 0
        %790 = vmatprep.subr.bf16.mxu0 0
        %791 = vmatpush2.bf16.xpose.msra.mxu0 0
        %792 = vmatprep.mubr.bf16.mxu0 0
        %793 = vmatmul.mubr.bf16.gmra.mxu0 %v755
        %v794 = vpop.f32.mrf.mxu0
        %v795 = vadd.f32 %v638, %v794
        %v796 = vpop.f32.mrf.mxu0
        %v797 = vpop.f32.mrf.mxu0
        %v798 = vpop.f32.mrf.mxu0
        %799 = vdwg.mxu0
        %v800 = vsel %vm639, %v795, -inf
        %801 = vmax.xlane.f32.xlu0 %v800
        %v802 = vpop.xlane.xlu0 %801
        %v803 = vsub.f32 %v795, %v802
        %v804 = vmul.f32 %v803, 1.442695
        %v805 = vpow.pop %v804
        %v806 = vsel %vm639, %v805, 0.0
        %807 = vadd.xlane.f32.xlu0 %v806
        %v808 = vpop.xlane.xlu0 %807
        %v809 = vrcp.pop %v808
        %v810 = vmul.f32 %v805, %v809
        %v811 = vpack.c.bf16 %v810, %v810
        %813 = vrot.lane.b32.xlu0 %v632, 120
        %v814 = vpop.permute.xlu0 %813
        %v816 = vsel %vm639, %v811, 0
        %v819 = vsel %vm701, %v814, 0
        %821 = vmatprep.subr.bf16.mxu0 0
        %822 = vmatpush1.bf16.msra.mxu0 0
        %823 = vmatprep.subr.bf16.mxu0 0
        %824 = vmatpush1.bf16.msra.mxu0 0
        %825 = vmatprep.subr.bf16.mxu0 0
        %826 = vmatpush1.bf16.msra.mxu0 0
        %827 = vmatprep.subr.bf16.mxu0 0
        %828 = vmatpush1.bf16.msra.mxu0 0
        %829 = vmatprep.subr.bf16.mxu0 0
        %830 = vmatpush1.bf16.msra.mxu0 0
        %831 = vmatprep.subr.bf16.mxu0 0
        %832 = vmatpush1.bf16.msra.mxu0 0
        %833 = vmatprep.subr.bf16.mxu0 0
        %834 = vmatpush1.bf16.msra.mxu0 0
        %835 = vmatprep.subr.bf16.mxu0 0
        %836 = vmatpush1.bf16.msra.mxu0 %v819
        %837 = vmatprep.subr.bf16.mxu0 0
        %838 = vmatpush2.bf16.msra.mxu0 0
        %839 = vmatprep.subr.bf16.mxu0 0
        %840 = vmatpush2.bf16.msra.mxu0 0
        %841 = vmatprep.subr.bf16.mxu0 0
        %842 = vmatpush2.bf16.msra.mxu0 0
        %843 = vmatprep.subr.bf16.mxu0 0
        %844 = vmatpush2.bf16.msra.mxu0 0
        %845 = vmatprep.subr.bf16.mxu0 0
        %846 = vmatpush2.bf16.msra.mxu0 0
        %847 = vmatprep.subr.bf16.mxu0 0
        %848 = vmatpush2.bf16.msra.mxu0 0
        %849 = vmatprep.subr.bf16.mxu0 0
        %850 = vmatpush2.bf16.msra.mxu0 0
        %851 = vmatprep.subr.bf16.mxu0 0
        %852 = vmatpush2.bf16.msra.mxu0 0
        %853 = vmatprep.mubr.bf16.mxu0 0
        %854 = vmatmul.mubr.bf16.gmra.mxu0 %v816
        %v855 = vpop.f32.mrf.mxu0
        %v856 = vadd.f32 0.0, %v855
        %v857 = vpop.f32.mrf.mxu0
        %v858 = vpop.f32.mrf.mxu0
        %v859 = vpop.f32.mrf.mxu0
        %860 = vdwg.mxu0
        %v861 = vpack.c.bf16 %v856, %v856
        %v863 = vunpack.c.l.b16 %v861
        %v864 = vpack.c.b16 %v863, %v863
        %865 = vrot.lane.b32.xlu0 %v864, 8
        %v866 = vpop.permute.xlu0 %865
        %vm868 = vcmask 126016
        %869 = vst.msk [vmem:[#allocation2] sm:$0xf] %vm868, %v866
        %870 = vrot.lane.b32.xlu0 %v508, 112
        %v871 = vpop.permute.xlu0 %870
        %872 = vrot.lane.b32.xlu0 %v570, 112
        %v873 = vpop.permute.xlu0 %872
        %v875 = vsel %vm639, %v871, 0
        %v878 = vsel %vm639, %v873, 0
        %880 = vmatprep.subr.bf16.mxu0 0
        %881 = vmatpush1.bf16.xpose.msra.mxu0 0
        %882 = vmatprep.subr.bf16.mxu0 0
        %883 = vmatpush1.bf16.xpose.msra.mxu0 0
        %884 = vmatprep.subr.bf16.mxu0 0
        %885 = vmatpush1.bf16.xpose.msra.mxu0 0
        %886 = vmatprep.subr.bf16.mxu0 0
        %887 = vmatpush1.bf16.xpose.msra.mxu0 0
        %888 = vmatprep.subr.bf16.mxu0 0
        %889 = vmatpush1.bf16.xpose.msra.mxu0 0
        %890 = vmatprep.subr.bf16.mxu0 0
        %891 = vmatpush1.bf16.xpose.msra.mxu0 0
        %892 = vmatprep.subr.bf16.mxu0 0
        %893 = vmatpush1.bf16.xpose.msra.mxu0 0
        %894 = vmatprep.subr.bf16.mxu0 0
        %895 = vmatpush1.bf16.xpose.msra.mxu0 %v878
        %896 = vmatprep.subr.bf16.mxu0 0
        %897 = vmatpush2.bf16.xpose.msra.mxu0 0
        %898 = vmatprep.subr.bf16.mxu0 0
        %899 = vmatpush2.bf16.xpose.msra.mxu0 0
        %900 = vmatprep.subr.bf16.mxu0 0
        %901 = vmatpush2.bf16.xpose.msra.mxu0 0
        %902 = vmatprep.subr.bf16.mxu0 0
        %903 = vmatpush2.bf16.xpose.msra.mxu0 0
        %904 = vmatprep.subr.bf16.mxu0 0
        %905 = vmatpush2.bf16.xpose.msra.mxu0 0
        %906 = vmatprep.subr.bf16.mxu0 0
        %907 = vmatpush2.bf16.xpose.msra.mxu0 0
        %908 = vmatprep.subr.bf16.mxu0 0
        %909 = vmatpush2.bf16.xpose.msra.mxu0 0
        %910 = vmatprep.subr.bf16.mxu0 0
        %911 = vmatpush2.bf16.xpose.msra.mxu0 0
        %912 = vmatprep.mubr.bf16.mxu0 0
        %913 = vmatmul.mubr.bf16.gmra.mxu0 %v875
        %v914 = vpop.f32.mrf.mxu0
        %v915 = vadd.f32 %v638, %v914
        %v916 = vpop.f32.mrf.mxu0
        %v917 = vpop.f32.mrf.mxu0
        %v918 = vpop.f32.mrf.mxu0
        %919 = vdwg.mxu0
        %v920 = vsel %vm639, %v915, -inf
        %921 = vmax.xlane.f32.xlu0 %v920
        %v922 = vpop.xlane.xlu0 %921
        %v923 = vsub.f32 %v915, %v922
        %v924 = vmul.f32 %v923, 1.442695
        %v925 = vpow.pop %v924
        %v926 = vsel %vm639, %v925, 0.0
        %927 = vadd.xlane.f32.xlu0 %v926
        %v928 = vpop.xlane.xlu0 %927
        %v929 = vrcp.pop %v928
        %v930 = vmul.f32 %v925, %v929
        %v931 = vpack.c.bf16 %v930, %v930
        %932 = vrot.lane.b32.xlu0 %v632, 112
        %v933 = vpop.permute.xlu0 %932
        %v935 = vsel %vm639, %v931, 0
        %v938 = vsel %vm701, %v933, 0
        %940 = vmatprep.subr.bf16.mxu0 0
        %941 = vmatpush1.bf16.msra.mxu0 0
        %942 = vmatprep.subr.bf16.mxu0 0
        %943 = vmatpush1.bf16.msra.mxu0 0
        %944 = vmatprep.subr.bf16.mxu0 0
        %945 = vmatpush1.bf16.msra.mxu0 0
        %946 = vmatprep.subr.bf16.mxu0 0
        %947 = vmatpush1.bf16.msra.mxu0 0
        %948 = vmatprep.subr.bf16.mxu0 0
        %949 = vmatpush1.bf16.msra.mxu0 0
        %950 = vmatprep.subr.bf16.mxu0 0
        %951 = vmatpush1.bf16.msra.mxu0 0
        %952 = vmatprep.subr.bf16.mxu0 0
        %953 = vmatpush1.bf16.msra.mxu0 0
        %954 = vmatprep.subr.bf16.mxu0 0
        %955 = vmatpush1.bf16.msra.mxu0 %v938
        %956 = vmatprep.subr.bf16.mxu0 0
        %957 = vmatpush2.bf16.msra.mxu0 0
        %958 = vmatprep.subr.bf16.mxu0 0
        %959 = vmatpush2.bf16.msra.mxu0 0
        %960 = vmatprep.subr.bf16.mxu0 0
        %961 = vmatpush2.bf16.msra.mxu0 0
        %962 = vmatprep.subr.bf16.mxu0 0
        %963 = vmatpush2.bf16.msra.mxu0 0
        %964 = vmatprep.subr.bf16.mxu0 0
        %965 = vmatpush2.bf16.msra.mxu0 0
        %966 = vmatprep.subr.bf16.mxu0 0
        %967 = vmatpush2.bf16.msra.mxu0 0
        %968 = vmatprep.subr.bf16.mxu0 0
        %969 = vmatpush2.bf16.msra.mxu0 0
        %970 = vmatprep.subr.bf16.mxu0 0
        %971 = vmatpush2.bf16.msra.mxu0 0
        %972 = vmatprep.mubr.bf16.mxu0 0
        %973 = vmatmul.mubr.bf16.gmra.mxu0 %v935
        %v974 = vpop.f32.mrf.mxu0
        %v975 = vadd.f32 0.0, %v974
        %v976 = vpop.f32.mrf.mxu0
        %v977 = vpop.f32.mrf.mxu0
        %v978 = vpop.f32.mrf.mxu0
        %979 = vdwg.mxu0
        %v980 = vpack.c.bf16 %v975, %v975
        %v982 = vunpack.c.l.b16 %v980
        %v983 = vpack.c.b16 %v982, %v982
        %984 = vrot.lane.b32.xlu0 %v983, 16
        %v985 = vpop.permute.xlu0 %984
        %vm987 = vcmask 191616
        %988 = vst.msk [vmem:[#allocation2] sm:$0xf] %vm987, %v985
        %989 = vrot.lane.b32.xlu0 %v508, 104
        %v990 = vpop.permute.xlu0 %989
        %991 = vrot.lane.b32.xlu0 %v570, 104
        %v992 = vpop.permute.xlu0 %991
        %v994 = vsel %vm639, %v990, 0
        %v997 = vsel %vm639, %v992, 0
        %999 = vmatprep.subr.bf16.mxu0 0
        %1000 = vmatpush1.bf16.xpose.msra.mxu0 0
        %1001 = vmatprep.subr.bf16.mxu0 0
        %1002 = vmatpush1.bf16.xpose.msra.mxu0 0
        %1003 = vmatprep.subr.bf16.mxu0 0
        %1004 = vmatpush1.bf16.xpose.msra.mxu0 0
        %1005 = vmatprep.subr.bf16.mxu0 0
        %1006 = vmatpush1.bf16.xpose.msra.mxu0 0
        %1007 = vmatprep.subr.bf16.mxu0 0
        %1008 = vmatpush1.bf16.xpose.msra.mxu0 0
        %1009 = vmatprep.subr.bf16.mxu0 0
        %1010 = vmatpush1.bf16.xpose.msra.mxu0 0
        %1011 = vmatprep.subr.bf16.mxu0 0
        %1012 = vmatpush1.bf16.xpose.msra.mxu0 0
        %1013 = vmatprep.subr.bf16.mxu0 0
        %1014 = vmatpush1.bf16.xpose.msra.mxu0 %v997
        %1015 = vmatprep.subr.bf16.mxu0 0
        %1016 = vmatpush2.bf16.xpose.msra.mxu0 0
        %1017 = vmatprep.subr.bf16.mxu0 0
        %1018 = vmatpush2.bf16.xpose.msra.mxu0 0
        %1019 = vmatprep.subr.bf16.mxu0 0
        %1020 = vmatpush2.bf16.xpose.msra.mxu0 0
        %1021 = vmatprep.subr.bf16.mxu0 0
        %1022 = vmatpush2.bf16.xpose.msra.mxu0 0
        %1023 = vmatprep.subr.bf16.mxu0 0
        %1024 = vmatpush2.bf16.xpose.msra.mxu0 0
        %1025 = vmatprep.subr.bf16.mxu0 0
        %1026 = vmatpush2.bf16.xpose.msra.mxu0 0
        %1027 = vmatprep.subr.bf16.mxu0 0
        %1028 = vmatpush2.bf16.xpose.msra.mxu0 0
        %1029 = vmatprep.subr.bf16.mxu0 0
        %1030 = vmatpush2.bf16.xpose.msra.mxu0 0
        %1031 = vmatprep.mubr.bf16.mxu0 0
        %1032 = vmatmul.mubr.bf16.gmra.mxu0 %v994
        %v1033 = vpop.f32.mrf.mxu0
        %v1034 = vadd.f32 %v638, %v1033
        %v1035 = vpop.f32.mrf.mxu0
        %v1036 = vpop.f32.mrf.mxu0
        %v1037 = vpop.f32.mrf.mxu0
        %1038 = vdwg.mxu0
        %v1039 = vsel %vm639, %v1034, -inf
        %1040 = vmax.xlane.f32.xlu0 %v1039
        %v1041 = vpop.xlane.xlu0 %1040
        %v1042 = vsub.f32 %v1034, %v1041
        %v1043 = vmul.f32 %v1042, 1.442695
        %v1044 = vpow.pop %v1043
        %v1045 = vsel %vm639, %v1044, 0.0
        %1046 = vadd.xlane.f32.xlu0 %v1045
        %v1047 = vpop.xlane.xlu0 %1046
        %v1048 = vrcp.pop %v1047
        %v1049 = vmul.f32 %v1044, %v1048
        %v1050 = vpack.c.bf16 %v1049, %v1049
        %1051 = vrot.lane.b32.xlu0 %v632, 104
        %v1052 = vpop.permute.xlu0 %1051
        %v1054 = vsel %vm639, %v1050, 0
        %v1057 = vsel %vm701, %v1052, 0
        %1059 = vmatprep.subr.bf16.mxu0 0
        %1060 = vmatpush1.bf16.msra.mxu0 0
        %1061 = vmatprep.subr.bf16.mxu0 0
        %1062 = vmatpush1.bf16.msra.mxu0 0
        %1063 = vmatprep.subr.bf16.mxu0 0
        %1064 = vmatpush1.bf16.msra.mxu0 0
        %1065 = vmatprep.subr.bf16.mxu0 0
        %1066 = vmatpush1.bf16.msra.mxu0 0
        %1067 = vmatprep.subr.bf16.mxu0 0
        %1068 = vmatpush1.bf16.msra.mxu0 0
        %1069 = vmatprep.subr.bf16.mxu0 0
        %1070 = vmatpush1.bf16.msra.mxu0 0
        %1071 = vmatprep.subr.bf16.mxu0 0
        %1072 = vmatpush1.bf16.msra.mxu0 0
        %1073 = vmatprep.subr.bf16.mxu0 0
        %1074 = vmatpush1.bf16.msra.mxu0 %v1057
        %1075 = vmatprep.subr.bf16.mxu0 0
        %1076 = vmatpush2.bf16.msra.mxu0 0
        %1077 = vmatprep.subr.bf16.mxu0 0
        %1078 = vmatpush2.bf16.msra.mxu0 0
        %1079 = vmatprep.subr.bf16.mxu0 0
        %1080 = vmatpush2.bf16.msra.mxu0 0
        %1081 = vmatprep.subr.bf16.mxu0 0
        %1082 = vmatpush2.bf16.msra.mxu0 0
        %1083 = vmatprep.subr.bf16.mxu0 0
        %1084 = vmatpush2.bf16.msra.mxu0 0
        %1085 = vmatprep.subr.bf16.mxu0 0
        %1086 = vmatpush2.bf16.msra.mxu0 0
        %1087 = vmatprep.subr.bf16.mxu0 0
        %1088 = vmatpush2.bf16.msra.mxu0 0
        %1089 = vmatprep.subr.bf16.mxu0 0
        %1090 = vmatpush2.bf16.msra.mxu0 0
        %1091 = vmatprep.mubr.bf16.mxu0 0
        %1092 = vmatmul.mubr.bf16.gmra.mxu0 %v1054
        %v1093 = vpop.f32.mrf.mxu0
        %v1094 = vadd.f32 0.0, %v1093
        %v1095 = vpop.f32.mrf.mxu0
        %v1096 = vpop.f32.mrf.mxu0
        %v1097 = vpop.f32.mrf.mxu0
        %1098 = vdwg.mxu0
        %v1099 = vpack.c.bf16 %v1094, %v1094
        %v1101 = vunpack.c.l.b16 %v1099
        %v1102 = vpack.c.b16 %v1101, %v1101
        %1103 = vrot.lane.b32.xlu0 %v1102, 24
        %v1104 = vpop.permute.xlu0 %1103
        %vm1106 = vcmask 257216
        %1107 = vst.msk [vmem:[#allocation2] sm:$0xf] %vm1106, %v1104
        %v1108 = vld [vmem:[#allocation2] sm:$0xf]
        %v1109 = vld [vmem:[#allocation16] sm:$0xf]
        %v1110 = vld [vmem:[#allocation16 + $0x4] sm:$0xf]
        %v1111 = vld [vmem:[#allocation16 + $0x8] sm:$0xf]
        %v1112 = vld [vmem:[#allocation16 + $0xc] sm:$0xf]
        %v1117 = vunpack.c.l.b16 %v1109
        %v1118 = vunpack.c.l.b16 %v1110
        %v1119 = vunpack.c.l.b16 %v1111
        %v1120 = vunpack.c.l.b16 %v1112
        %v1121 = vpack.c.b16 %v1118, %v1117
        %v1122 = vpack.c.b16 %v1120, %v1119
        %v1126 = vsel %vm464, %v1108, 0
        %1128 = vmatprep.subr.bf16.mxu0 0
        %1129 = vmatpush1.bf16.msra.mxu0 0
        %1130 = vmatprep.subr.bf16.mxu0 0
        %1131 = vmatpush1.bf16.msra.mxu0 0
        %1132 = vmatprep.subr.bf16.mxu0 0
        %1133 = vmatpush1.bf16.msra.mxu0 0
        %1134 = vmatprep.subr.bf16.mxu0 0
        %1135 = vmatpush1.bf16.msra.mxu0 0
        %1136 = vmatprep.subr.bf16.mxu0 0
        %1137 = vmatpush1.bf16.msra.mxu0 0
        %1138 = vmatprep.subr.bf16.mxu0 0
        %1139 = vmatpush1.bf16.msra.mxu0 0
        %1140 = vmatprep.subr.bf16.mxu0 0
        %1141 = vmatpush1.bf16.msra.mxu0 %v1122
        %1142 = vmatprep.subr.bf16.mxu0 0
        %1143 = vmatpush1.bf16.msra.mxu0 %v1121
        %1144 = vmatprep.subr.bf16.mxu0 0
        %1145 = vmatpush2.bf16.msra.mxu0 0
        %1146 = vmatprep.subr.bf16.mxu0 0
        %1147 = vmatpush2.bf16.msra.mxu0 0
        %1148 = vmatprep.subr.bf16.mxu0 0
        %1149 = vmatpush2.bf16.msra.mxu0 0
        %1150 = vmatprep.subr.bf16.mxu0 0
        %1151 = vmatpush2.bf16.msra.mxu0 0
        %1152 = vmatprep.subr.bf16.mxu0 0
        %1153 = vmatpush2.bf16.msra.mxu0 0
        %1154 = vmatprep.subr.bf16.mxu0 0
        %1155 = vmatpush2.bf16.msra.mxu0 0
        %1156 = vmatprep.subr.bf16.mxu0 0
        %1157 = vmatpush2.bf16.msra.mxu0 0
        %1158 = vmatprep.subr.bf16.mxu0 0
        %1159 = vmatpush2.bf16.msra.mxu0 0
        %1160 = vmatprep.mubr.bf16.mxu0 0
        %1161 = vmatmul.mubr.bf16.gmra.mxu0 %v1126
        %v1162 = vpop.f32.mrf.mxu0
        %v1163 = vadd.f32 0.0, %v1162
        %v1164 = vpop.f32.mrf.mxu0
        %v1165 = vpop.f32.mrf.mxu0
        %v1166 = vpop.f32.mrf.mxu0
        %1167 = vdwg.mxu0
        %1168 = vst.msk [vmem:[%s444] sm:$0xff] %vm464, %v1163
        %s1169 = sand.u32 %s220, 1
        %s1170 = scalar_lea.sflag [#allocation7], %s1169
        %s1171 = sand.u32 %s220, 1
        %s1172 = smul.addr %s1171, 8
        %s1173 = scalar_lea.vmem [#allocation17], %s1172
        // Predicated region
        $region77: #{tpu_custom_call.1} parent=47 // pred_check
          %p1174 = pneg %p230
        $region78: #{tpu_custom_call.1} parent=47 // pred_check_branch
          %1176 = sbr.rel (%p1174) target = $region80
        $region79: #{tpu_custom_call.1} parent=47 // pred_region
          %s1178 = ssub.s32 128, 128
          %1179 = vsyncadd %s1170, %s1178
          %s1180 = sadd.s32 %s39, %s38
          %s1181 = smul.addr %s1180, 128
          %s1182 = scalar_lea.hbm %s8, %s1181
          %s1184 = sshll.u32 %s1173, 4
          %s1185 = int_to_ptr.vmem [resolvable:$true] %s1184
          %1187 = dma.vmem_to_hbm [thread:$0]  %s1185, 128, %s1182, %s1170
        $region80: #{tpu_custom_call.1} parent=47 // pred_fallthru
          _
      $region48: #{tpu_custom_call.1} parent=5 // pred_fallthru
        _
      %p1188 = scmp.le.s32.totalorder 2, %s29
      // Predicated region
      $region81: #{tpu_custom_call.1} parent=5 // pred_check
        %p1189 = pneg %p1188
      $region82: #{tpu_custom_call.1} parent=5 // pred_check_branch
        %1191 = sbr.rel (%p1189) target = $region84
      $region83: #{tpu_custom_call.1} parent=5 // pred_region
        %s1192 = ssub.s32 %s29, 2
        // Predicated region
        $region85: #{tpu_custom_call.1} parent=83 // pred_check
          %p1193 = pneg %p236
        $region86: #{tpu_custom_call.1} parent=83 // pred_check_branch
          %1195 = sbr.rel (%p1193) target = $region88
        $region87: #{tpu_custom_call.1} parent=83 // pred_region
          %s1196 = sand.u32 %s221, 1
          %s1197 = scalar_lea.sflag [#allocation7], %s1196
          %s1198 = sand.u32 %s221, 1
          %s1199 = smul.addr %s1198, 8
          %s1200 = scalar_lea.vmem [#allocation17], %s1199
          %1201 = dma.done %s1197, 128
        $region88: #{tpu_custom_call.1} parent=83 // pred_fallthru
          _
      $region84: #{tpu_custom_call.1} parent=5 // pred_fallthru
        _
    $region6: #{tpu_custom_call.1} parent=1 // loop_footer
      %s33 = sadd.s32 1, %s29
    $region7: #{tpu_custom_call.1} parent=1 // loop_footer_branch
      %28 = sbr.rel target = $region3
    $region8: #{tpu_custom_call.1} parent=1 // loop_exit
      _
    %1202 = vsyncpa [#allocation6], 1
    %s1203 = scalar_lea.sflag [#allocation6], 1
    %1204 = vsyncpa %s1203, 1
    %1205 = vsyncpa [#allocation9], 1
    %s1206 = scalar_lea.sflag [#allocation9], 1
    %1207 = vsyncpa %s1206, 1
    %1208 = vsyncpa [#allocation12], 1
    %1209 = vsyncpa [#allocation15], 1
    %1210 = vsyncpa [#allocation7], 1
    %s1211 = scalar_lea.sflag [#allocation7], 1
    %1212 = vsyncpa %s1211, 1

</llo_original>
